<compile_context>
chip_gen: v7x
topology: tpu7x:2x2x1
jax: 0.10.0
libtpu: 0.0.40
codegen_flags: <defaults>
</compile_context>

<pallas_src>
import functools

import jax
import jax.numpy as jnp
from jax.experimental import pallas as pl
from jax.experimental.pallas import tpu as pltpu

LANE = 128          # TPU lane width
H_PAD = 128         # padded hidden width (original hidden=64)
OUT_PAD = 128       # padded output width used *in-register* (action_size=4)


def dqn_kernel(x_ref, w1_ref, b1_ref, w2_ref, b2_ref, w3_ref, b3_ref, o_ref,
               *, precision, action_size):
    # One grid step = one (TB, S) batch tile. Weights/biases use a constant
    # index_map, so they stay VMEM-resident across grid steps; each step is
    # 3 lane-aligned MXU matmuls + a VPU bias/ReLU epilogue (f32, v5e-safe).
    x = x_ref[...].astype(w1_ref.dtype)          # bf16 cast (if any) in-kernel
    h1 = jnp.dot(x, w1_ref[...],
                 preferred_element_type=jnp.float32, precision=precision)
    h1 = jnp.maximum(h1 + b1_ref[...], 0.0)
    h2 = jnp.dot(h1.astype(w2_ref.dtype), w2_ref[...],
                 preferred_element_type=jnp.float32, precision=precision)
    h2 = jnp.maximum(h2 + b2_ref[...], 0.0)
    o = jnp.dot(h2.astype(w3_ref.dtype), w3_ref[...],
                preferred_element_type=jnp.float32, precision=precision)
    o = o + b3_ref[...]
    # Only the real action lanes ever leave VMEM (16 B/row instead of 512).
    o_ref[...] = o[:, :action_size]
    # TODO(synk): for the greedy-action RL loop, fuse argmax / target-network
    # max-Q here so only (TB, 1) values are written back to HBM.


def prepare_params(params, *, use_bf16=False):
    """One-time parameter prep: lane-pad hidden/output to 128 and optionally
    cast weights to bf16. Do this once per parameter update, NOT per forward.

    Zero padding is exact: padded hidden units have zero in-weights/bias, so
    relu(0)=0 feeds zero out-weights; padded output lanes are never stored.
    """
    w1, b1, w2, b2, w3, b3 = (params[k] for k in ("w1", "b1", "w2", "b2", "w3", "b3"))
    state_size, hidden = w1.shape
    action_size = w3.shape[1]
    assert hidden <= H_PAD and action_size <= OUT_PAD

    w1p = jnp.pad(w1, ((0, 0), (0, H_PAD - hidden)))
    b1p = jnp.pad(b1, ((0, 0), (0, H_PAD - hidden)))
    w2p = jnp.pad(w2, ((0, H_PAD - hidden), (0, H_PAD - hidden)))
    b2p = jnp.pad(b2, ((0, 0), (0, H_PAD - hidden)))
    w3p = jnp.pad(w3, ((0, H_PAD - hidden), (0, OUT_PAD - action_size)))
    b3p = jnp.pad(b3, ((0, 0), (0, OUT_PAD - action_size)))

    if use_bf16:
        # bf16 operands for the native v6e/v7x MXU rate; biases stay f32 so
        # the accumulate + bias/ReLU epilogue is f32 everywhere.
        w1p, w2p, w3p = (w.astype(jnp.bfloat16) for w in (w1p, w2p, w3p))

    return {
        "w1": w1p, "b1": b1p, "w2": w2p, "b2": b2p, "w3": w3p, "b3": b3p,
        "state_size": state_size, "action_size": action_size,
    }


def _round8(n):
    return ((n + 7) // 8) * 8


def _choose_block_b(b8, target=1024):
    """Pick a batch tile: multiple of 8 that divides the 8-rounded batch.

    Targets ~1024 rows (near-roofline HBM utilization; ~1.3 MiB/step double-
    buffered at S=16 — huge headroom even under v7x's 64 MiB VMEM), while
    guaranteeing >= 2 grid steps once b8 >= 512 so the "parallel" batch axis
    shards across v7x's two TensorCores.
    """
    if b8 <= target:
        if b8 >= 512 and b8 % 16 == 0:
            return b8 // 2
        return b8
    cap = (min(target, b8 // 2) // 8) * 8
    for tb in range(cap, 7, -8):
        if b8 % tb == 0:
            return tb
    return 8  # unreachable: 8 always divides b8


def dqn_forward(x, prep, *, block_b=None, precision=None):
    """x: (B, state_size) float32; prep: output of prepare_params().

    Returns (B, action_size) float32 Q-values.
    """
    B, S = x.shape
    assert S == prep["state_size"], (S, prep["state_size"])
    action_size = prep["action_size"]
    w1p, b1p, w2p, b2p, w3p, b3p = (
        prep["w1"], prep["b1"], prep["w2"], prep["b2"], prep["w3"], prep["b3"])

    if precision is None:
        # f32 params: exact parity with the f32 reference. Note: HIGHEST is
        # exact *because* it lowers to the multi-pass bf16 MXU decomposition
        # (costly on v5e); pass precision=Precision.HIGH or use bf16 params
        # when bit-parity is not required.
        precision = (jax.lax.Precision.DEFAULT
                     if w1p.dtype == jnp.bfloat16 else jax.lax.Precision.HIGHEST)

    b8 = _round8(B)
    if block_b is None:
        block_b = _choose_block_b(b8)
    assert block_b % 8 == 0, block_b
    b_pad = pl.cdiv(b8, block_b) * block_b
    xp = jnp.pad(x, ((0, b_pad - B), (0, 0))) if b_pad != B else x

    grid = (b_pad // block_b,)

    # Per-step VMEM budget: double-buffered x/out tiles + resident weights.
    weight_bytes = sum(int(a.size) * a.dtype.itemsize
                       for a in (w1p, b1p, w2p, b2p, w3p, b3p))
    step_bytes = 2 * block_b * (S * 4 + action_size * 4) + 2 * weight_bytes
    assert step_bytes < 24 * (1 << 20), step_bytes  # << 32 MiB scoped default

    def const2d(shape):
        # Same block every grid step -> weights/biases stay resident in VMEM.
        return pl.BlockSpec(shape, lambda i: (0, 0))

    out = pl.pallas_call(
        functools.partial(dqn_kernel, precision=precision,
                          action_size=action_size),
        out_shape=jax.ShapeDtypeStruct((b_pad, action_size), jnp.float32),
        grid=grid,
        in_specs=[
            pl.BlockSpec((block_b, S), lambda i: (i, 0)),   # x: tiled over batch
            const2d((S, H_PAD)),                            # w1
            const2d((1, H_PAD)),                            # b1
            const2d((H_PAD, H_PAD)),                        # w2
            const2d((1, H_PAD)),                            # b2
            const2d((H_PAD, OUT_PAD)),                      # w3
            const2d((1, OUT_PAD)),                          # b3
        ],
        out_specs=pl.BlockSpec((block_b, action_size), lambda i: (i, 0)),
        compiler_params=pltpu.CompilerParams(
            # Batch axis is embarrassingly parallel -> 2-TC sharding on v7x.
            dimension_semantics=("parallel",),
        ),
    )(xp, w1p, b1p, w2p, b2p, w3p, b3p)

    return out[:B] if b_pad != B else out


def init_dqn_params(key, state_size, action_size, hidden=64):
    """PyTorch nn.Linear default init: U[-1/sqrt(fan_in), 1/sqrt(fan_in)].
    Weights stored (in, out); biases (1, out) for clean 2-D broadcasting."""
    keys = jax.random.split(key, 6)

    def linear(kw, kb, fan_in, fan_out):
        bound = 1.0 / jnp.sqrt(jnp.float32(fan_in))
        w = jax.random.uniform(kw, (fan_in, fan_out), jnp.float32, -bound, bound)
        b = jax.random.uniform(kb, (1, fan_out), jnp.float32, -bound, bound)
        return w, b

    w1, b1 = linear(keys[0], keys[1], state_size, hidden)
    w2, b2 = linear(keys[2], keys[3], hidden, hidden)
    w3, b3 = linear(keys[4], keys[5], hidden, action_size)
    return {"w1": w1, "b1": b1, "w2": w2, "b2": b2, "w3": w3, "b3": b3}


def dqn_forward_ref(x, params):
    """Pure-JAX reference (exact f32)."""
    hp = jax.lax.Precision.HIGHEST
    h1 = jnp.maximum(jnp.dot(x, params["w1"], precision=hp) + params["b1"], 0.0)
    h2 = jnp.maximum(jnp.dot(h1, params["w2"], precision=hp) + params["b2"], 0.0)
    return jnp.dot(h2, params["w3"], precision=hp) + params["b3"]


if __name__ == "__main__":
    key = jax.random.PRNGKey(0)
    k_param, k_x1, k_x2 = jax.random.split(key, 3)

    state_size = 16
    action_size = 4
    params = init_dqn_params(k_param, state_size, action_size, hidden=64)

    # One-time parameter prep (padding / optional bf16 cast) — hoisted out of
    # the forward path per the perf review.
    prep_f32 = prepare_params(params)
    prep_bf16 = prepare_params(params, use_bf16=True)

    # Small RL-style batch, exact f32 path.
    x_small = jax.random.normal(k_x1, (8, state_size), dtype=jnp.float32)
    out_small = jax.block_until_ready(dqn_forward(x_small, prep_f32))
    ref_small = dqn_forward_ref(x_small, params)
    assert out_small.shape == (8, action_size), out_small.shape
    assert jnp.allclose(out_small, ref_small, atol=1e-5, rtol=1e-5), "mismatch (B=8)"

    # Ragged batch (not a multiple of 8) with a small explicit tile exercises
    # batch padding, the multi-step grid, and the narrow (TB, 4) output store.
    x_ragged = jax.random.normal(k_x2, (50, state_size), dtype=jnp.float32)
    out_ragged = jax.block_until_ready(dqn_forward(x_ragged, prep_f32, block_b=8))
    ref_ragged = dqn_forward_ref(x_ragged, params)
    assert out_ragged.shape == (50, action_size), out_ragged.shape
    assert jnp.allclose(out_ragged, ref_ragged, atol=1e-5, rtol=1e-5), "mismatch (B=50)"

    # bf16 fast path (native v6e/v7x MXU rate): looser tolerance vs f32 ref.
    out_bf16 = jax.block_until_ready(dqn_forward(x_small, prep_bf16))
    assert out_bf16.shape == (8, action_size), out_bf16.shape
    assert jnp.allclose(out_bf16, ref_small, atol=5e-2, rtol=5e-2), "mismatch (bf16)"

    print("KERNEL_OK")
</pallas_src>

<mosaic_0001>
module attributes {stable_mosaic.version = 11 : i64} {
  func.func @dqn_kernel(%arg0: i32, %arg1: memref<8x16xf32, #tpu.memory_space<vmem>>, %arg2: memref<16x128xf32, #tpu.memory_space<vmem>>, %arg3: memref<1x128xf32, #tpu.memory_space<vmem>>, %arg4: memref<128x128xf32, #tpu.memory_space<vmem>>, %arg5: memref<1x128xf32, #tpu.memory_space<vmem>>, %arg6: memref<128x128xf32, #tpu.memory_space<vmem>>, %arg7: memref<1x128xf32, #tpu.memory_space<vmem>>, %arg8: memref<8x4xf32, #tpu.memory_space<vmem>>) attributes {dimension_semantics = [#tpu.dimension_semantics<parallel>], iteration_bounds = array<i64: 1>, scalar_prefetch = 0 : i64, scratch_operands = 0 : i64, tpu.core_type = #tpu.core_type<tc>, window_params = [{transform_indices = @transform_0, window_bounds = array<i64: 8, 16>}, {pipeline_mode = #tpu.pipeline_mode<synchronous>, transform_indices = @transform_1, window_bounds = array<i64: 16, 128>}, {pipeline_mode = #tpu.pipeline_mode<synchronous>, transform_indices = @transform_2, window_bounds = array<i64: 1, 128>}, {pipeline_mode = #tpu.pipeline_mode<synchronous>, transform_indices = @transform_3, window_bounds = array<i64: 128, 128>}, {pipeline_mode = #tpu.pipeline_mode<synchronous>, transform_indices = @transform_4, window_bounds = array<i64: 1, 128>}, {pipeline_mode = #tpu.pipeline_mode<synchronous>, transform_indices = @transform_5, window_bounds = array<i64: 128, 128>}, {pipeline_mode = #tpu.pipeline_mode<synchronous>, transform_indices = @transform_6, window_bounds = array<i64: 1, 128>}, {transform_indices = @transform_7, window_bounds = array<i64: 8, 4>}]} {
    %c0 = arith.constant 0 : index
    %c0_0 = arith.constant 0 : index
    %0 = vector.load %arg1[%c0, %c0_0] : memref<8x16xf32, #tpu.memory_space<vmem>>, vector<8x16xf32>
    %c0_1 = arith.constant 0 : index
    %c0_2 = arith.constant 0 : index
    %1 = vector.load %arg2[%c0_1, %c0_2] : memref<16x128xf32, #tpu.memory_space<vmem>>, vector<16x128xf32>
    %cst = arith.constant dense<0.000000e+00> : vector<8x128xf32>
    %2 = tpu.matmul %0, %1, %cst {dimension_numbers = #tpu.dot_dimension_numbers<[1], [0], [0], [1], [0, 0, 1, 1], [], []>, precision = #tpu.contract_precision<fp32>} : vector<8x16xf32>, vector<16x128xf32>, vector<8x128xf32> -> vector<8x128xf32>
    %c0_3 = arith.constant 0 : index
    %c0_4 = arith.constant 0 : index
    %3 = vector.load %arg3[%c0_3, %c0_4] : memref<1x128xf32, #tpu.memory_space<vmem>>, vector<1x128xf32>
    %4 = vector.broadcast %3 : vector<1x128xf32> to vector<8x128xf32>
    %5 = arith.addf %2, %4 : vector<8x128xf32>
    %cst_5 = arith.constant 0.000000e+00 : f32
    %6 = vector.broadcast %cst_5 : f32 to vector<8x128xf32>
    %7 = arith.maximumf %5, %6 : vector<8x128xf32>
    %c0_6 = arith.constant 0 : index
    %c0_7 = arith.constant 0 : index
    %8 = vector.load %arg4[%c0_6, %c0_7] : memref<128x128xf32, #tpu.memory_space<vmem>>, vector<128x128xf32>
    %cst_8 = arith.constant dense<0.000000e+00> : vector<8x128xf32>
    %9 = tpu.matmul %7, %8, %cst_8 {dimension_numbers = #tpu.dot_dimension_numbers<[1], [0], [0], [1], [0, 0, 1, 1], [], []>, precision = #tpu.contract_precision<fp32>} : vector<8x128xf32>, vector<128x128xf32>, vector<8x128xf32> -> vector<8x128xf32>
    %c0_9 = arith.constant 0 : index
    %c0_10 = arith.constant 0 : index
    %10 = vector.load %arg5[%c0_9, %c0_10] : memref<1x128xf32, #tpu.memory_space<vmem>>, vector<1x128xf32>
    %11 = vector.broadcast %10 : vector<1x128xf32> to vector<8x128xf32>
    %12 = arith.addf %9, %11 : vector<8x128xf32>
    %cst_11 = arith.constant 0.000000e+00 : f32
    %13 = vector.broadcast %cst_11 : f32 to vector<8x128xf32>
    %14 = arith.maximumf %12, %13 : vector<8x128xf32>
    %c0_12 = arith.constant 0 : index
    %c0_13 = arith.constant 0 : index
    %15 = vector.load %arg6[%c0_12, %c0_13] : memref<128x128xf32, #tpu.memory_space<vmem>>, vector<128x128xf32>
    %cst_14 = arith.constant dense<0.000000e+00> : vector<8x128xf32>
    %16 = tpu.matmul %14, %15, %cst_14 {dimension_numbers = #tpu.dot_dimension_numbers<[1], [0], [0], [1], [0, 0, 1, 1], [], []>, precision = #tpu.contract_precision<fp32>} : vector<8x128xf32>, vector<128x128xf32>, vector<8x128xf32> -> vector<8x128xf32>
    %c0_15 = arith.constant 0 : index
    %c0_16 = arith.constant 0 : index
    %17 = vector.load %arg7[%c0_15, %c0_16] : memref<1x128xf32, #tpu.memory_space<vmem>>, vector<1x128xf32>
    %18 = vector.broadcast %17 : vector<1x128xf32> to vector<8x128xf32>
    %19 = arith.addf %16, %18 : vector<8x128xf32>
    %20 = vector.extract_strided_slice %19 {offsets = [0, 0], sizes = [8, 4], strides = [1, 1]} : vector<8x128xf32> to vector<8x4xf32>
    %c0_17 = arith.constant 0 : index
    %c0_18 = arith.constant 0 : index
    %21 = vector.load %arg8[%c0_17, %c0_18] : memref<8x4xf32, #tpu.memory_space<vmem>>, vector<8x4xf32>
    tpu.vector_store %arg8[%c0_17, %c0_18], %20 {strides = array<i32>} : memref<8x4xf32, #tpu.memory_space<vmem>>, vector<8x4xf32>,
    return
  }
  func.func @transform_0(%arg0: i32) -> (i32, i32) {
    %c0_i32 = arith.constant 0 : i32
    %c0_i32_0 = arith.constant 0 : i32
    return %arg0, %c0_i32 : i32, i32
  }
  func.func @transform_1(%arg0: i32) -> (i32, i32) {
    %c0_i32 = arith.constant 0 : i32
    %c0_i32_0 = arith.constant 0 : i32
    %c0_i32_1 = arith.constant 0 : i32
    return %c0_i32, %c0_i32_0 : i32, i32
  }
  func.func @transform_2(%arg0: i32) -> (i32, i32) {
    %c0_i32 = arith.constant 0 : i32
    %c0_i32_0 = arith.constant 0 : i32
    %c0_i32_1 = arith.constant 0 : i32
    return %c0_i32, %c0_i32_0 : i32, i32
  }
  func.func @transform_3(%arg0: i32) -> (i32, i32) {
    %c0_i32 = arith.constant 0 : i32
    %c0_i32_0 = arith.constant 0 : i32
    %c0_i32_1 = arith.constant 0 : i32
    return %c0_i32, %c0_i32_0 : i32, i32
  }
  func.func @transform_4(%arg0: i32) -> (i32, i32) {
    %c0_i32 = arith.constant 0 : i32
    %c0_i32_0 = arith.constant 0 : i32
    %c0_i32_1 = arith.constant 0 : i32
    return %c0_i32, %c0_i32_0 : i32, i32
  }
  func.func @transform_5(%arg0: i32) -> (i32, i32) {
    %c0_i32 = arith.constant 0 : i32
    %c0_i32_0 = arith.constant 0 : i32
    %c0_i32_1 = arith.constant 0 : i32
    return %c0_i32, %c0_i32_0 : i32, i32
  }
  func.func @transform_6(%arg0: i32) -> (i32, i32) {
    %c0_i32 = arith.constant 0 : i32
    %c0_i32_0 = arith.constant 0 : i32
    %c0_i32_1 = arith.constant 0 : i32
    return %c0_i32, %c0_i32_0 : i32, i32
  }
  func.func @transform_7(%arg0: i32) -> (i32, i32) {
    %c0_i32 = arith.constant 0 : i32
    %c0_i32_0 = arith.constant 0 : i32
    return %arg0, %c0_i32 : i32, i32
  }
}

</mosaic_0001>

<llo_original>
// kernel: tpu_custom_call.1
$region0: #{tpu_custom_call.1}
  #allocation0 [shape = 'u32[]', space=smem, size = 0x4, offset = 0x4, fixed_abs, tag = 'smem constant byte address 0x4 - core index']
  #allocation1 [shape = 'u32[144,128]{1,0:T(1,128)}', space=vmem, size = 0x12000, scoped, tag = 'internal scratch']
  %s0 = inlined_call_operand.hbm [shape: f32[8,16], index: 0, kind: input, shape index: {}]
  %s1 = inlined_call_operand.hbm [shape: f32[16,128], index: 1, kind: input, shape index: {}]
  %s2 = inlined_call_operand.vmem [shape: f32[1,128], index: 2, kind: input, shape index: {}]
  %s3 = inlined_call_operand.hbm [shape: f32[128,128], index: 3, kind: input, shape index: {}]
  %s4 = inlined_call_operand.vmem [shape: f32[1,128], index: 4, kind: input, shape index: {}]
  %s5 = inlined_call_operand.hbm [shape: f32[128,128], index: 5, kind: input, shape index: {}]
  %s6 = inlined_call_operand.vmem [shape: f32[1,128], index: 6, kind: input, shape index: {}]
  %s7 = inlined_call_operand.vmem [shape: f32[8,4], index: 7, kind: output, shape index: {}]
  %s8 = sld [smem:[#allocation0]]
  $region54: #{tpu_custom_call.1} parent=0
    _
  %s10 = ssub.s32 1, %s8
  %s11 = scalar_select 0, %s10, %s8
  $region1: #{tpu_custom_call.1} parent=0
    #allocation2 [shape = 'u8[4096]{0}', space=vmem, size = 0x1000, scoped, tag = 'input window, operand 0, single buffered']
    #allocation3 [shape = 's32[1]{0}', space=sflag, size = 0x4, scoped, tag = 'scoped memory for tpu_custom_call.1']
    #allocation4 [shape = 'u8[8192]{0}', space=vmem, size = 0x2000, scoped, tag = 'input window, operand 1, single buffered']
    #allocation5 [shape = 's32[1]{0}', space=sflag, size = 0x4, scoped, tag = 'scoped memory for tpu_custom_call.1']
    #allocation6 [shape = 'u8[65536]{0}', space=vmem, size = 0x10000, scoped, tag = 'input window, operand 3, single buffered']
    #allocation7 [shape = 'u8[65536]{0}', space=vmem, size = 0x10000, scoped, tag = 'input window, operand 5, single buffered']
    #allocation8 [shape = 's32[1]{0}', space=sflag, size = 0x4, scoped, tag = 'scoped memory for tpu_custom_call.1']
    %12 = vsyncpa [#allocation3], 0
    %13 = vsyncpa [#allocation5], 0
    %14 = vsyncpa [#allocation8], 0
    // Predicated region
    $region2: #{tpu_custom_call.1} parent=1 // pred_check
      _
    $region3: #{tpu_custom_call.1} parent=1 // pred_check_branch
      %16 = sbr.rel (0) target = $region5
    $region4: #{tpu_custom_call.1} parent=1 // pred_region
      %s18 = ssub.s32 128, 128
      %19 = vsyncadd [#allocation3], %s18
      %s21 = sshll.u32 [#allocation2], 4
      %s22 = int_to_ptr.vmem [resolvable:$true] %s21
      %24 = dma.hbm_to_vmem [thread:$0]  %s0, 128, %s22, [#allocation3]
    $region5: #{tpu_custom_call.1} parent=1 // pred_fallthru
      _
    // Predicated region
    $region6: #{tpu_custom_call.1} parent=1 // pred_check
      _
    $region7: #{tpu_custom_call.1} parent=1 // pred_check_branch
      %26 = sbr.rel (0) target = $region9
    $region8: #{tpu_custom_call.1} parent=1 // pred_region
      %s28 = ssub.s32 256, 256
      %29 = vsyncadd [#allocation5], %s28
      %s30 = sshll.u32 [#allocation4], 4
      %s31 = int_to_ptr.vmem [resolvable:$true] %s30
      %36 = dma.hbm_to_vmem [thread:$0]  %s1, 256, %s31, [#allocation5], 128, 128, 8
    $region9: #{tpu_custom_call.1} parent=1 // pred_fallthru
      _
    // Predicated region
    $region10: #{tpu_custom_call.1} parent=1 // pred_check
      _
    $region11: #{tpu_custom_call.1} parent=1 // pred_check_branch
      %38 = sbr.rel (0) target = $region13
    $region12: #{tpu_custom_call.1} parent=1 // pred_region
      _
    $region13: #{tpu_custom_call.1} parent=1 // pred_fallthru
      _
    // Predicated region
    $region14: #{tpu_custom_call.1} parent=1 // pred_check
      _
    $region15: #{tpu_custom_call.1} parent=1 // pred_check_branch
      %40 = sbr.rel (0) target = $region17
    $region16: #{tpu_custom_call.1} parent=1 // pred_region
      %s42 = ssub.s32 2048, 2048
      %43 = vsyncadd [#allocation5], %s42
      %s44 = sshll.u32 [#allocation6], 4
      %s45 = int_to_ptr.vmem [resolvable:$true] %s44
      %50 = dma.hbm_to_vmem [thread:$0]  %s3, 2048, %s45, [#allocation5], 128, 128, 8
    $region17: #{tpu_custom_call.1} parent=1 // pred_fallthru
      _
    // Predicated region
    $region18: #{tpu_custom_call.1} parent=1 // pred_check
      _
    $region19: #{tpu_custom_call.1} parent=1 // pred_check_branch
      %52 = sbr.rel (0) target = $region21
    $region20: #{tpu_custom_call.1} parent=1 // pred_region
      _
    $region21: #{tpu_custom_call.1} parent=1 // pred_fallthru
      _
    // Predicated region
    $region22: #{tpu_custom_call.1} parent=1 // pred_check
      _
    $region23: #{tpu_custom_call.1} parent=1 // pred_check_branch
      %54 = sbr.rel (0) target = $region25
    $region24: #{tpu_custom_call.1} parent=1 // pred_region
      %s56 = ssub.s32 2048, 2048
      %57 = vsyncadd [#allocation8], %s56
      %s58 = sshll.u32 [#allocation7], 4
      %s59 = int_to_ptr.vmem [resolvable:$true] %s58
      %64 = dma.hbm_to_vmem [thread:$0]  %s5, 2048, %s59, [#allocation8], 128, 128, 8
    $region25: #{tpu_custom_call.1} parent=1 // pred_fallthru
      _
    // Predicated region
    $region26: #{tpu_custom_call.1} parent=1 // pred_check
      _
    $region27: #{tpu_custom_call.1} parent=1 // pred_check_branch
      %66 = sbr.rel (0) target = $region29
    $region28: #{tpu_custom_call.1} parent=1 // pred_region
      _
    $region29: #{tpu_custom_call.1} parent=1 // pred_fallthru
      _
    // Predicated region
    $region30: #{tpu_custom_call.1} parent=1 // pred_check
      _
    $region31: #{tpu_custom_call.1} parent=1 // pred_check_branch
      %68 = sbr.rel (0) target = $region33
    $region32: #{tpu_custom_call.1} parent=1 // pred_region
      %69 = dma.done [#allocation3], 128
    $region33: #{tpu_custom_call.1} parent=1 // pred_fallthru
      _
    // Predicated region
    $region34: #{tpu_custom_call.1} parent=1 // pred_check
      _
    $region35: #{tpu_custom_call.1} parent=1 // pred_check_branch
      %71 = sbr.rel (0) target = $region37
    $region36: #{tpu_custom_call.1} parent=1 // pred_region
      %72 = dma.done [#allocation5], 256
    $region37: #{tpu_custom_call.1} parent=1 // pred_fallthru
      _
    // Predicated region
    $region38: #{tpu_custom_call.1} parent=1 // pred_check
      _
    $region39: #{tpu_custom_call.1} parent=1 // pred_check_branch
      %74 = sbr.rel (0) target = $region41
    $region40: #{tpu_custom_call.1} parent=1 // pred_region
      %75 = dma.done [#allocation5], 2048
    $region41: #{tpu_custom_call.1} parent=1 // pred_fallthru
      _
    // Predicated region
    $region42: #{tpu_custom_call.1} parent=1 // pred_check
      _
    $region43: #{tpu_custom_call.1} parent=1 // pred_check_branch
      %77 = sbr.rel (0) target = $region45
    $region44: #{tpu_custom_call.1} parent=1 // pred_region
      %78 = dma.done [#allocation8], 2048
    $region45: #{tpu_custom_call.1} parent=1 // pred_fallthru
      _
    %v79 = vld [vmem:[#allocation2] sm:$0xff]
    %v80 = vld [vmem:[#allocation4] sm:$0xff]
    %v81 = vld [vmem:[#allocation4 + $0x8] sm:$0xff]
    %v82 = vld [vmem:[%s2] sm:$0x1]
    %v84 = vlaneseq
    %v85 = vshrl.u32 %v84, 7
    %v86 = vsub.s32 0, %v85
    %v87 = vrot.slane %v82, %v86
    %vm89 = vcmask 130048
    %v91 = vsel %vm89, %v79, 0
    %93 = vmatprep.subr.mxu0 0.0
    %v94 = vand.u32 %v80, 4294901760
    %95 = vmatpush1.msra.mxu0 %v94
    %96 = vmatprep.subr.mxu0 0.0
    %v97 = vand.u32 %v81, 4294901760
    %98 = vmatpush1.msra.mxu0 %v97
    %99 = vmatprep.subr.mxu0 0.0
    %100 = vmatpush1.msra.mxu0 0.0
    %101 = vmatprep.subr.mxu0 0.0
    %102 = vmatpush1.msra.mxu0 0.0
    %103 = vmatprep.subr.mxu0 0.0
    %104 = vmatpush1.msra.mxu0 0.0
    %105 = vmatprep.subr.mxu0 0.0
    %106 = vmatpush1.msra.mxu0 0.0
    %107 = vmatprep.subr.mxu0 0.0
    %108 = vmatpush1.msra.mxu0 0.0
    %109 = vmatprep.subr.mxu0 0.0
    %110 = vmatpush1.msra.mxu0 0.0
    %111 = vmatprep.subr.mxu0 0.0
    %112 = vmatpush1.msra.mxu0 0.0
    %113 = vmatprep.subr.mxu0 0.0
    %114 = vmatpush1.msra.mxu0 0.0
    %115 = vmatprep.subr.mxu0 0.0
    %116 = vmatpush1.msra.mxu0 0.0
    %117 = vmatprep.subr.mxu0 0.0
    %118 = vmatpush1.msra.mxu0 0.0
    %119 = vmatprep.subr.mxu0 0.0
    %120 = vmatpush1.msra.mxu0 0.0
    %121 = vmatprep.subr.mxu0 0.0
    %122 = vmatpush1.msra.mxu0 0.0
    %123 = vmatprep.subr.mxu0 0.0
    %124 = vmatpush1.msra.mxu0 0.0
    %125 = vmatprep.subr.mxu0 0.0
    %126 = vmatpush1.msra.mxu0 0.0
    %127 = vmatprep.subr.mxu0 0.0
    %128 = vmatpush1.msra.mxu0 0.0
    %129 = vmatprep.subr.mxu0 0.0
    %130 = vmatpush1.msra.mxu0 0.0
    %131 = vmatprep.subr.mxu0 0.0
    %132 = vmatpush1.msra.mxu0 0.0
    %133 = vmatprep.subr.mxu0 0.0
    %134 = vmatpush1.msra.mxu0 0.0
    %135 = vmatprep.subr.mxu0 0.0
    %136 = vmatpush1.msra.mxu0 0.0
    %137 = vmatprep.subr.mxu0 0.0
    %138 = vmatpush1.msra.mxu0 0.0
    %139 = vmatprep.subr.mxu0 0.0
    %140 = vmatpush1.msra.mxu0 0.0
    %141 = vmatprep.subr.mxu0 0.0
    %142 = vmatpush1.msra.mxu0 0.0
    %143 = vmatprep.subr.mxu0 0.0
    %144 = vmatpush1.msra.mxu0 0.0
    %145 = vmatprep.subr.mxu0 0.0
    %146 = vmatpush1.msra.mxu0 0.0
    %147 = vmatprep.subr.mxu0 0.0
    %148 = vmatpush1.msra.mxu0 0.0
    %149 = vmatprep.subr.mxu0 0.0
    %150 = vmatpush1.msra.mxu0 0.0
    %151 = vmatprep.subr.mxu0 0.0
    %152 = vmatpush1.msra.mxu0 0.0
    %153 = vmatprep.subr.mxu0 0.0
    %154 = vmatpush1.msra.mxu0 0.0
    %155 = vmatprep.subr.mxu0 0.0
    %156 = vmatpush1.msra.mxu0 0.0
    %157 = vmatprep.subr.mxu0 0.0
    %158 = vmatpush1.msra.mxu0 0.0
    %159 = vmatprep.mubr.f32.mxu0 0.0
    %v160 = vand.u32 %v91, 4294901760
    %v161 = vsub.f32 %v91, %v160
    %v162 = vand.u32 %v161, 4294901760
    %v163 = vsub.f32 %v161, %v162
    %v164 = vand.u32 %v163, 4294901760
    %165 = vmatmul.mubr.f32.gmra.mrb[0].mxu0 %v164
    %v166 = vpop.f32.mrb[0].mxu0
    %v167 = vadd.f32 %v87, %v166
    %v168 = vpop.f32.mrb[0].mxu0
    %169 = vdwg.mxu0
    %170 = vmatprep.subr.mxu0 0.0
    %v171 = vand.u32 %v80, 4294901760
    %v172 = vsub.f32 %v80, %v171
    %v173 = vand.u32 %v172, 4294901760
    %v174 = vsub.f32 %v172, %v173
    %v175 = vand.u32 %v174, 4294901760
    %176 = vmatpush1.msra.mxu0 %v175
    %177 = vmatprep.subr.mxu0 0.0
    %v178 = vand.u32 %v81, 4294901760
    %v179 = vsub.f32 %v81, %v178
    %v180 = vand.u32 %v179, 4294901760
    %v181 = vsub.f32 %v179, %v180
    %v182 = vand.u32 %v181, 4294901760
    %183 = vmatpush1.msra.mxu0 %v182
    %184 = vmatprep.subr.mxu0 0.0
    %185 = vmatpush1.msra.mxu0 0.0
    %186 = vmatprep.subr.mxu0 0.0
    %187 = vmatpush1.msra.mxu0 0.0
    %188 = vmatprep.subr.mxu0 0.0
    %189 = vmatpush1.msra.mxu0 0.0
    %190 = vmatprep.subr.mxu0 0.0
    %191 = vmatpush1.msra.mxu0 0.0
    %192 = vmatprep.subr.mxu0 0.0
    %193 = vmatpush1.msra.mxu0 0.0
    %194 = vmatprep.subr.mxu0 0.0
    %195 = vmatpush1.msra.mxu0 0.0
    %196 = vmatprep.subr.mxu0 0.0
    %197 = vmatpush1.msra.mxu0 0.0
    %198 = vmatprep.subr.mxu0 0.0
    %199 = vmatpush1.msra.mxu0 0.0
    %200 = vmatprep.subr.mxu0 0.0
    %201 = vmatpush1.msra.mxu0 0.0
    %202 = vmatprep.subr.mxu0 0.0
    %203 = vmatpush1.msra.mxu0 0.0
    %204 = vmatprep.subr.mxu0 0.0
    %205 = vmatpush1.msra.mxu0 0.0
    %206 = vmatprep.subr.mxu0 0.0
    %207 = vmatpush1.msra.mxu0 0.0
    %208 = vmatprep.subr.mxu0 0.0
    %209 = vmatpush1.msra.mxu0 0.0
    %210 = vmatprep.subr.mxu0 0.0
    %211 = vmatpush1.msra.mxu0 0.0
    %212 = vmatprep.subr.mxu0 0.0
    %213 = vmatpush1.msra.mxu0 0.0
    %214 = vmatprep.subr.mxu0 0.0
    %215 = vmatpush1.msra.mxu0 0.0
    %216 = vmatprep.subr.mxu0 0.0
    %217 = vmatpush1.msra.mxu0 0.0
    %218 = vmatprep.subr.mxu0 0.0
    %219 = vmatpush1.msra.mxu0 0.0
    %220 = vmatprep.subr.mxu0 0.0
    %221 = vmatpush1.msra.mxu0 0.0
    %222 = vmatprep.subr.mxu0 0.0
    %223 = vmatpush1.msra.mxu0 0.0
    %224 = vmatprep.subr.mxu0 0.0
    %225 = vmatpush1.msra.mxu0 0.0
    %226 = vmatprep.subr.mxu0 0.0
    %227 = vmatpush1.msra.mxu0 0.0
    %228 = vmatprep.subr.mxu0 0.0
    %229 = vmatpush1.msra.mxu0 0.0
    %230 = vmatprep.subr.mxu0 0.0
    %231 = vmatpush1.msra.mxu0 0.0
    %232 = vmatprep.subr.mxu0 0.0
    %233 = vmatpush1.msra.mxu0 0.0
    %234 = vmatprep.subr.mxu0 0.0
    %235 = vmatpush1.msra.mxu0 0.0
    %236 = vmatprep.subr.mxu0 0.0
    %237 = vmatpush1.msra.mxu0 0.0
    %238 = vmatprep.subr.mxu0 0.0
    %239 = vmatpush1.msra.mxu0 0.0
    %240 = vmatprep.subr.mxu0 0.0
    %241 = vmatpush1.msra.mxu0 0.0
    %242 = vmatprep.subr.mxu0 0.0
    %243 = vmatpush1.msra.mxu0 0.0
    %244 = vmatprep.mubr.f32.mxu0 0.0
    %v245 = vand.u32 %v91, 4294901760
    %246 = vmatmul.mubr.f32.gmra.mrb[0].mxu0 %v245
    %v247 = vpop.f32.mrb[0].mxu0
    %v248 = vadd.f32 %v167, %v247
    %v249 = vpop.f32.mrb[0].mxu0
    %250 = vdwg.mxu0
    %251 = vmatprep.subr.mxu0 0.0
    %v252 = vand.u32 %v80, 4294901760
    %v253 = vsub.f32 %v80, %v252
    %254 = vmatpush1.msra.mxu0 %v253
    %255 = vmatprep.subr.mxu0 0.0
    %v256 = vand.u32 %v81, 4294901760
    %v257 = vsub.f32 %v81, %v256
    %258 = vmatpush1.msra.mxu0 %v257
    %259 = vmatprep.subr.mxu0 0.0
    %260 = vmatpush1.msra.mxu0 0.0
    %261 = vmatprep.subr.mxu0 0.0
    %262 = vmatpush1.msra.mxu0 0.0
    %263 = vmatprep.subr.mxu0 0.0
    %264 = vmatpush1.msra.mxu0 0.0
    %265 = vmatprep.subr.mxu0 0.0
    %266 = vmatpush1.msra.mxu0 0.0
    %267 = vmatprep.subr.mxu0 0.0
    %268 = vmatpush1.msra.mxu0 0.0
    %269 = vmatprep.subr.mxu0 0.0
    %270 = vmatpush1.msra.mxu0 0.0
    %271 = vmatprep.subr.mxu0 0.0
    %272 = vmatpush1.msra.mxu0 0.0
    %273 = vmatprep.subr.mxu0 0.0
    %274 = vmatpush1.msra.mxu0 0.0
    %275 = vmatprep.subr.mxu0 0.0
    %276 = vmatpush1.msra.mxu0 0.0
    %277 = vmatprep.subr.mxu0 0.0
    %278 = vmatpush1.msra.mxu0 0.0
    %279 = vmatprep.subr.mxu0 0.0
    %280 = vmatpush1.msra.mxu0 0.0
    %281 = vmatprep.subr.mxu0 0.0
    %282 = vmatpush1.msra.mxu0 0.0
    %283 = vmatprep.subr.mxu0 0.0
    %284 = vmatpush1.msra.mxu0 0.0
    %285 = vmatprep.subr.mxu0 0.0
    %286 = vmatpush1.msra.mxu0 0.0
    %287 = vmatprep.subr.mxu0 0.0
    %288 = vmatpush1.msra.mxu0 0.0
    %289 = vmatprep.subr.mxu0 0.0
    %290 = vmatpush1.msra.mxu0 0.0
    %291 = vmatprep.subr.mxu0 0.0
    %292 = vmatpush1.msra.mxu0 0.0
    %293 = vmatprep.subr.mxu0 0.0
    %294 = vmatpush1.msra.mxu0 0.0
    %295 = vmatprep.subr.mxu0 0.0
    %296 = vmatpush1.msra.mxu0 0.0
    %297 = vmatprep.subr.mxu0 0.0
    %298 = vmatpush1.msra.mxu0 0.0
    %299 = vmatprep.subr.mxu0 0.0
    %300 = vmatpush1.msra.mxu0 0.0
    %301 = vmatprep.subr.mxu0 0.0
    %302 = vmatpush1.msra.mxu0 0.0
    %303 = vmatprep.subr.mxu0 0.0
    %304 = vmatpush1.msra.mxu0 0.0
    %305 = vmatprep.subr.mxu0 0.0
    %306 = vmatpush1.msra.mxu0 0.0
    %307 = vmatprep.subr.mxu0 0.0
    %308 = vmatpush1.msra.mxu0 0.0
    %309 = vmatprep.subr.mxu0 0.0
    %310 = vmatpush1.msra.mxu0 0.0
    %311 = vmatprep.subr.mxu0 0.0
    %312 = vmatpush1.msra.mxu0 0.0
    %313 = vmatprep.subr.mxu0 0.0
    %314 = vmatpush1.msra.mxu0 0.0
    %315 = vmatprep.subr.mxu0 0.0
    %316 = vmatpush1.msra.mxu0 0.0
    %317 = vmatprep.subr.mxu0 0.0
    %318 = vmatpush1.msra.mxu0 0.0
    %319 = vmatprep.mubr.f32.mxu0 0.0
    %v320 = vand.u32 %v91, 4294901760
    %v321 = vsub.f32 %v91, %v320
    %322 = vmatmul.mubr.f32.gmra.mrb[0].mxu0 %v321
    %v323 = vpop.f32.mrb[0].mxu0
    %v324 = vadd.f32 %v248, %v323
    %v325 = vpop.f32.mrb[0].mxu0
    %326 = vdwg.mxu0
    %327 = vmatprep.subr.mxu0 0.0
    %v328 = vand.u32 %v80, 4294901760
    %329 = vmatpush1.msra.mxu0 %v328
    %330 = vmatprep.subr.mxu0 0.0
    %v331 = vand.u32 %v81, 4294901760
    %332 = vmatpush1.msra.mxu0 %v331
    %333 = vmatprep.subr.mxu0 0.0
    %334 = vmatpush1.msra.mxu0 0.0
    %335 = vmatprep.subr.mxu0 0.0
    %336 = vmatpush1.msra.mxu0 0.0
    %337 = vmatprep.subr.mxu0 0.0
    %338 = vmatpush1.msra.mxu0 0.0
    %339 = vmatprep.subr.mxu0 0.0
    %340 = vmatpush1.msra.mxu0 0.0
    %341 = vmatprep.subr.mxu0 0.0
    %342 = vmatpush1.msra.mxu0 0.0
    %343 = vmatprep.subr.mxu0 0.0
    %344 = vmatpush1.msra.mxu0 0.0
    %345 = vmatprep.subr.mxu0 0.0
    %346 = vmatpush1.msra.mxu0 0.0
    %347 = vmatprep.subr.mxu0 0.0
    %348 = vmatpush1.msra.mxu0 0.0
    %349 = vmatprep.subr.mxu0 0.0
    %350 = vmatpush1.msra.mxu0 0.0
    %351 = vmatprep.subr.mxu0 0.0
    %352 = vmatpush1.msra.mxu0 0.0
    %353 = vmatprep.subr.mxu0 0.0
    %354 = vmatpush1.msra.mxu0 0.0
    %355 = vmatprep.subr.mxu0 0.0
    %356 = vmatpush1.msra.mxu0 0.0
    %357 = vmatprep.subr.mxu0 0.0
    %358 = vmatpush1.msra.mxu0 0.0
    %359 = vmatprep.subr.mxu0 0.0
    %360 = vmatpush1.msra.mxu0 0.0
    %361 = vmatprep.subr.mxu0 0.0
    %362 = vmatpush1.msra.mxu0 0.0
    %363 = vmatprep.subr.mxu0 0.0
    %364 = vmatpush1.msra.mxu0 0.0
    %365 = vmatprep.subr.mxu0 0.0
    %366 = vmatpush1.msra.mxu0 0.0
    %367 = vmatprep.subr.mxu0 0.0
    %368 = vmatpush1.msra.mxu0 0.0
    %369 = vmatprep.subr.mxu0 0.0
    %370 = vmatpush1.msra.mxu0 0.0
    %371 = vmatprep.subr.mxu0 0.0
    %372 = vmatpush1.msra.mxu0 0.0
    %373 = vmatprep.subr.mxu0 0.0
    %374 = vmatpush1.msra.mxu0 0.0
    %375 = vmatprep.subr.mxu0 0.0
    %376 = vmatpush1.msra.mxu0 0.0
    %377 = vmatprep.subr.mxu0 0.0
    %378 = vmatpush1.msra.mxu0 0.0
    %379 = vmatprep.subr.mxu0 0.0
    %380 = vmatpush1.msra.mxu0 0.0
    %381 = vmatprep.subr.mxu0 0.0
    %382 = vmatpush1.msra.mxu0 0.0
    %383 = vmatprep.subr.mxu0 0.0
    %384 = vmatpush1.msra.mxu0 0.0
    %385 = vmatprep.subr.mxu0 0.0
    %386 = vmatpush1.msra.mxu0 0.0
    %387 = vmatprep.subr.mxu0 0.0
    %388 = vmatpush1.msra.mxu0 0.0
    %389 = vmatprep.subr.mxu0 0.0
    %390 = vmatpush1.msra.mxu0 0.0
    %391 = vmatprep.subr.mxu0 0.0
    %392 = vmatpush1.msra.mxu0 0.0
    %393 = vmatprep.mubr.f32.mxu0 0.0
    %v394 = vand.u32 %v91, 4294901760
    %v395 = vsub.f32 %v91, %v394
    %v396 = vand.u32 %v395, 4294901760
    %397 = vmatmul.mubr.f32.gmra.mrb[0].mxu0 %v396
    %v398 = vpop.f32.mrb[0].mxu0
    %v399 = vadd.f32 %v324, %v398
    %v400 = vpop.f32.mrb[0].mxu0
    %401 = vdwg.mxu0
    %402 = vmatprep.subr.mxu0 0.0
    %v403 = vand.u32 %v80, 4294901760
    %v404 = vsub.f32 %v80, %v403
    %v405 = vand.u32 %v404, 4294901760
    %406 = vmatpush1.msra.mxu0 %v405
    %407 = vmatprep.subr.mxu0 0.0
    %v408 = vand.u32 %v81, 4294901760
    %v409 = vsub.f32 %v81, %v408
    %v410 = vand.u32 %v409, 4294901760
    %411 = vmatpush1.msra.mxu0 %v410
    %412 = vmatprep.subr.mxu0 0.0
    %413 = vmatpush1.msra.mxu0 0.0
    %414 = vmatprep.subr.mxu0 0.0
    %415 = vmatpush1.msra.mxu0 0.0
    %416 = vmatprep.subr.mxu0 0.0
    %417 = vmatpush1.msra.mxu0 0.0
    %418 = vmatprep.subr.mxu0 0.0
    %419 = vmatpush1.msra.mxu0 0.0
    %420 = vmatprep.subr.mxu0 0.0
    %421 = vmatpush1.msra.mxu0 0.0
    %422 = vmatprep.subr.mxu0 0.0
    %423 = vmatpush1.msra.mxu0 0.0
    %424 = vmatprep.subr.mxu0 0.0
    %425 = vmatpush1.msra.mxu0 0.0
    %426 = vmatprep.subr.mxu0 0.0
    %427 = vmatpush1.msra.mxu0 0.0
    %428 = vmatprep.subr.mxu0 0.0
    %429 = vmatpush1.msra.mxu0 0.0
    %430 = vmatprep.subr.mxu0 0.0
    %431 = vmatpush1.msra.mxu0 0.0
    %432 = vmatprep.subr.mxu0 0.0
    %433 = vmatpush1.msra.mxu0 0.0
    %434 = vmatprep.subr.mxu0 0.0
    %435 = vmatpush1.msra.mxu0 0.0
    %436 = vmatprep.subr.mxu0 0.0
    %437 = vmatpush1.msra.mxu0 0.0
    %438 = vmatprep.subr.mxu0 0.0
    %439 = vmatpush1.msra.mxu0 0.0
    %440 = vmatprep.subr.mxu0 0.0
    %441 = vmatpush1.msra.mxu0 0.0
    %442 = vmatprep.subr.mxu0 0.0
    %443 = vmatpush1.msra.mxu0 0.0
    %444 = vmatprep.subr.mxu0 0.0
    %445 = vmatpush1.msra.mxu0 0.0
    %446 = vmatprep.subr.mxu0 0.0
    %447 = vmatpush1.msra.mxu0 0.0
    %448 = vmatprep.subr.mxu0 0.0
    %449 = vmatpush1.msra.mxu0 0.0
    %450 = vmatprep.subr.mxu0 0.0
    %451 = vmatpush1.msra.mxu0 0.0
    %452 = vmatprep.subr.mxu0 0.0
    %453 = vmatpush1.msra.mxu0 0.0
    %454 = vmatprep.subr.mxu0 0.0
    %455 = vmatpush1.msra.mxu0 0.0
    %456 = vmatprep.subr.mxu0 0.0
    %457 = vmatpush1.msra.mxu0 0.0
    %458 = vmatprep.subr.mxu0 0.0
    %459 = vmatpush1.msra.mxu0 0.0
    %460 = vmatprep.subr.mxu0 0.0
    %461 = vmatpush1.msra.mxu0 0.0
    %462 = vmatprep.subr.mxu0 0.0
    %463 = vmatpush1.msra.mxu0 0.0
    %464 = vmatprep.subr.mxu0 0.0
    %465 = vmatpush1.msra.mxu0 0.0
    %466 = vmatprep.subr.mxu0 0.0
    %467 = vmatpush1.msra.mxu0 0.0
    %468 = vmatprep.subr.mxu0 0.0
    %469 = vmatpush1.msra.mxu0 0.0
    %470 = vmatprep.subr.mxu0 0.0
    %471 = vmatpush1.msra.mxu0 0.0
    %472 = vmatprep.mubr.f32.mxu0 0.0
    %v473 = vand.u32 %v91, 4294901760
    %474 = vmatmul.mubr.f32.gmra.mrb[0].mxu0 %v473
    %v475 = vpop.f32.mrb[0].mxu0
    %v476 = vadd.f32 %v399, %v475
    %v477 = vpop.f32.mrb[0].mxu0
    %478 = vdwg.mxu0
    %479 = vmatprep.subr.mxu0 0.0
    %v480 = vand.u32 %v80, 4294901760
    %481 = vmatpush1.msra.mxu0 %v480
    %482 = vmatprep.subr.mxu0 0.0
    %v483 = vand.u32 %v81, 4294901760
    %484 = vmatpush1.msra.mxu0 %v483
    %485 = vmatprep.subr.mxu0 0.0
    %486 = vmatpush1.msra.mxu0 0.0
    %487 = vmatprep.subr.mxu0 0.0
    %488 = vmatpush1.msra.mxu0 0.0
    %489 = vmatprep.subr.mxu0 0.0
    %490 = vmatpush1.msra.mxu0 0.0
    %491 = vmatprep.subr.mxu0 0.0
    %492 = vmatpush1.msra.mxu0 0.0
    %493 = vmatprep.subr.mxu0 0.0
    %494 = vmatpush1.msra.mxu0 0.0
    %495 = vmatprep.subr.mxu0 0.0
    %496 = vmatpush1.msra.mxu0 0.0
    %497 = vmatprep.subr.mxu0 0.0
    %498 = vmatpush1.msra.mxu0 0.0
    %499 = vmatprep.subr.mxu0 0.0
    %500 = vmatpush1.msra.mxu0 0.0
    %501 = vmatprep.subr.mxu0 0.0
    %502 = vmatpush1.msra.mxu0 0.0
    %503 = vmatprep.subr.mxu0 0.0
    %504 = vmatpush1.msra.mxu0 0.0
    %505 = vmatprep.subr.mxu0 0.0
    %506 = vmatpush1.msra.mxu0 0.0
    %507 = vmatprep.subr.mxu0 0.0
    %508 = vmatpush1.msra.mxu0 0.0
    %509 = vmatprep.subr.mxu0 0.0
    %510 = vmatpush1.msra.mxu0 0.0
    %511 = vmatprep.subr.mxu0 0.0
    %512 = vmatpush1.msra.mxu0 0.0
    %513 = vmatprep.subr.mxu0 0.0
    %514 = vmatpush1.msra.mxu0 0.0
    %515 = vmatprep.subr.mxu0 0.0
    %516 = vmatpush1.msra.mxu0 0.0
    %517 = vmatprep.subr.mxu0 0.0
    %518 = vmatpush1.msra.mxu0 0.0
    %519 = vmatprep.subr.mxu0 0.0
    %520 = vmatpush1.msra.mxu0 0.0
    %521 = vmatprep.subr.mxu0 0.0
    %522 = vmatpush1.msra.mxu0 0.0
    %523 = vmatprep.subr.mxu0 0.0
    %524 = vmatpush1.msra.mxu0 0.0
    %525 = vmatprep.subr.mxu0 0.0
    %526 = vmatpush1.msra.mxu0 0.0
    %527 = vmatprep.subr.mxu0 0.0
    %528 = vmatpush1.msra.mxu0 0.0
    %529 = vmatprep.subr.mxu0 0.0
    %530 = vmatpush1.msra.mxu0 0.0
    %531 = vmatprep.subr.mxu0 0.0
    %532 = vmatpush1.msra.mxu0 0.0
    %533 = vmatprep.subr.mxu0 0.0
    %534 = vmatpush1.msra.mxu0 0.0
    %535 = vmatprep.subr.mxu0 0.0
    %536 = vmatpush1.msra.mxu0 0.0
    %537 = vmatprep.subr.mxu0 0.0
    %538 = vmatpush1.msra.mxu0 0.0
    %539 = vmatprep.subr.mxu0 0.0
    %540 = vmatpush1.msra.mxu0 0.0
    %541 = vmatprep.subr.mxu0 0.0
    %542 = vmatpush1.msra.mxu0 0.0
    %543 = vmatprep.subr.mxu0 0.0
    %544 = vmatpush1.msra.mxu0 0.0
    %545 = vmatprep.mubr.f32.mxu0 0.0
    %v546 = vand.u32 %v91, 4294901760
    %547 = vmatmul.mubr.f32.gmra.mrb[0].mxu0 %v546
    %v548 = vpop.f32.mrb[0].mxu0
    %v549 = vadd.f32 %v476, %v548
    %v550 = vpop.f32.mrb[0].mxu0
    %551 = vdwg.mxu0
    %v552 = vmax.f32 %v549, 0.0
    %v553 = vld [vmem:[#allocation6] sm:$0xff]
    %v554 = vld [vmem:[#allocation6 + $0x8] sm:$0xff]
    %v555 = vld [vmem:[#allocation6 + $0x10] sm:$0xff]
    %v556 = vld [vmem:[#allocation6 + $0x18] sm:$0xff]
    %v557 = vld [vmem:[#allocation6 + $0x20] sm:$0xff]
    %v558 = vld [vmem:[#allocation6 + $0x28] sm:$0xff]
    %v559 = vld [vmem:[#allocation6 + $0x30] sm:$0xff]
    %v560 = vld [vmem:[#allocation6 + $0x38] sm:$0xff]
    %v561 = vld [vmem:[#allocation6 + $0x40] sm:$0xff]
    %v562 = vld [vmem:[#allocation6 + $0x48] sm:$0xff]
    %v563 = vld [vmem:[#allocation6 + $0x50] sm:$0xff]
    %v564 = vld [vmem:[#allocation6 + $0x58] sm:$0xff]
    %v565 = vld [vmem:[#allocation6 + $0x60] sm:$0xff]
    %v566 = vld [vmem:[#allocation6 + $0x68] sm:$0xff]
    %v567 = vld [vmem:[#allocation6 + $0x70] sm:$0xff]
    %v568 = vld [vmem:[#allocation6 + $0x78] sm:$0xff]
    %v569 = vld [vmem:[%s4] sm:$0x1]
    %v571 = vlaneseq
    %v572 = vshrl.u32 %v571, 7
    %v573 = vsub.s32 0, %v572
    %v574 = vrot.slane %v569, %v573
    %576 = vmatprep.subr.mxu0 0.0
    %v577 = vand.u32 %v553, 4294901760
    %578 = vmatpush1.msra.mxu0 %v577
    %579 = vmatprep.subr.mxu0 0.0
    %v580 = vand.u32 %v554, 4294901760
    %581 = vmatpush1.msra.mxu0 %v580
    %582 = vmatprep.subr.mxu0 0.0
    %v583 = vand.u32 %v555, 4294901760
    %584 = vmatpush1.msra.mxu0 %v583
    %585 = vmatprep.subr.mxu0 0.0
    %v586 = vand.u32 %v556, 4294901760
    %587 = vmatpush1.msra.mxu0 %v586
    %588 = vmatprep.subr.mxu0 0.0
    %v589 = vand.u32 %v557, 4294901760
    %590 = vmatpush1.msra.mxu0 %v589
    %591 = vmatprep.subr.mxu0 0.0
    %v592 = vand.u32 %v558, 4294901760
    %593 = vmatpush1.msra.mxu0 %v592
    %594 = vmatprep.subr.mxu0 0.0
    %v595 = vand.u32 %v559, 4294901760
    %596 = vmatpush1.msra.mxu0 %v595
    %597 = vmatprep.subr.mxu0 0.0
    %v598 = vand.u32 %v560, 4294901760
    %599 = vmatpush1.msra.mxu0 %v598
    %600 = vmatprep.subr.mxu0 0.0
    %v601 = vand.u32 %v561, 4294901760
    %602 = vmatpush1.msra.mxu0 %v601
    %603 = vmatprep.subr.mxu0 0.0
    %v604 = vand.u32 %v562, 4294901760
    %605 = vmatpush1.msra.mxu0 %v604
    %606 = vmatprep.subr.mxu0 0.0
    %v607 = vand.u32 %v563, 4294901760
    %608 = vmatpush1.msra.mxu0 %v607
    %609 = vmatprep.subr.mxu0 0.0
    %v610 = vand.u32 %v564, 4294901760
    %611 = vmatpush1.msra.mxu0 %v610
    %612 = vmatprep.subr.mxu0 0.0
    %v613 = vand.u32 %v565, 4294901760
    %614 = vmatpush1.msra.mxu0 %v613
    %615 = vmatprep.subr.mxu0 0.0
    %v616 = vand.u32 %v566, 4294901760
    %617 = vmatpush1.msra.mxu0 %v616
    %618 = vmatprep.subr.mxu0 0.0
    %v619 = vand.u32 %v567, 4294901760
    %620 = vmatpush1.msra.mxu0 %v619
    %621 = vmatprep.subr.mxu0 0.0
    %v622 = vand.u32 %v568, 4294901760
    %623 = vmatpush1.msra.mxu0 %v622
    %624 = vmatprep.subr.mxu0 0.0
    %625 = vmatpush1.msra.mxu0 0.0
    %626 = vmatprep.subr.mxu0 0.0
    %627 = vmatpush1.msra.mxu0 0.0
    %628 = vmatprep.subr.mxu0 0.0
    %629 = vmatpush1.msra.mxu0 0.0
    %630 = vmatprep.subr.mxu0 0.0
    %631 = vmatpush1.msra.mxu0 0.0
    %632 = vmatprep.subr.mxu0 0.0
    %633 = vmatpush1.msra.mxu0 0.0
    %634 = vmatprep.subr.mxu0 0.0
    %635 = vmatpush1.msra.mxu0 0.0
    %636 = vmatprep.subr.mxu0 0.0
    %637 = vmatpush1.msra.mxu0 0.0
    %638 = vmatprep.subr.mxu0 0.0
    %639 = vmatpush1.msra.mxu0 0.0
    %640 = vmatprep.subr.mxu0 0.0
    %641 = vmatpush1.msra.mxu0 0.0
    %642 = vmatprep.subr.mxu0 0.0
    %643 = vmatpush1.msra.mxu0 0.0
    %644 = vmatprep.subr.mxu0 0.0
    %645 = vmatpush1.msra.mxu0 0.0
    %646 = vmatprep.subr.mxu0 0.0
    %647 = vmatpush1.msra.mxu0 0.0
    %648 = vmatprep.subr.mxu0 0.0
    %649 = vmatpush1.msra.mxu0 0.0
    %650 = vmatprep.subr.mxu0 0.0
    %651 = vmatpush1.msra.mxu0 0.0
    %652 = vmatprep.subr.mxu0 0.0
    %653 = vmatpush1.msra.mxu0 0.0
    %654 = vmatprep.subr.mxu0 0.0
    %655 = vmatpush1.msra.mxu0 0.0
    %656 = vmatprep.mubr.f32.mxu0 0.0
    %v657 = vand.u32 %v552, 4294901760
    %v658 = vsub.f32 %v552, %v657
    %v659 = vand.u32 %v658, 4294901760
    %v660 = vsub.f32 %v658, %v659
    %v661 = vand.u32 %v660, 4294901760
    %662 = vmatmul.mubr.f32.gmra.mrb[0].mxu0 %v661
    %v663 = vpop.f32.mrb[0].mxu0
    %v664 = vadd.f32 %v574, %v663
    %v665 = vpop.f32.mrb[0].mxu0
    %666 = vdwg.mxu0
    %667 = vmatprep.subr.mxu0 0.0
    %v668 = vand.u32 %v553, 4294901760
    %v669 = vsub.f32 %v553, %v668
    %v670 = vand.u32 %v669, 4294901760
    %v671 = vsub.f32 %v669, %v670
    %v672 = vand.u32 %v671, 4294901760
    %673 = vmatpush1.msra.mxu0 %v672
    %674 = vmatprep.subr.mxu0 0.0
    %v675 = vand.u32 %v554, 4294901760
    %v676 = vsub.f32 %v554, %v675
    %v677 = vand.u32 %v676, 4294901760
    %v678 = vsub.f32 %v676, %v677
    %v679 = vand.u32 %v678, 4294901760
    %680 = vmatpush1.msra.mxu0 %v679
    %681 = vmatprep.subr.mxu0 0.0
    %v682 = vand.u32 %v555, 4294901760
    %v683 = vsub.f32 %v555, %v682
    %v684 = vand.u32 %v683, 4294901760
    %v685 = vsub.f32 %v683, %v684
    %v686 = vand.u32 %v685, 4294901760
    %687 = vmatpush1.msra.mxu0 %v686
    %688 = vmatprep.subr.mxu0 0.0
    %v689 = vand.u32 %v556, 4294901760
    %v690 = vsub.f32 %v556, %v689
    %v691 = vand.u32 %v690, 4294901760
    %v692 = vsub.f32 %v690, %v691
    %v693 = vand.u32 %v692, 4294901760
    %694 = vmatpush1.msra.mxu0 %v693
    %695 = vmatprep.subr.mxu0 0.0
    %v696 = vand.u32 %v557, 4294901760
    %v697 = vsub.f32 %v557, %v696
    %v698 = vand.u32 %v697, 4294901760
    %v699 = vsub.f32 %v697, %v698
    %v700 = vand.u32 %v699, 4294901760
    %701 = vmatpush1.msra.mxu0 %v700
    %702 = vmatprep.subr.mxu0 0.0
    %v703 = vand.u32 %v558, 4294901760
    %v704 = vsub.f32 %v558, %v703
    %v705 = vand.u32 %v704, 4294901760
    %v706 = vsub.f32 %v704, %v705
    %v707 = vand.u32 %v706, 4294901760
    %708 = vmatpush1.msra.mxu0 %v707
    %709 = vmatprep.subr.mxu0 0.0
    %v710 = vand.u32 %v559, 4294901760
    %v711 = vsub.f32 %v559, %v710
    %v712 = vand.u32 %v711, 4294901760
    %v713 = vsub.f32 %v711, %v712
    %v714 = vand.u32 %v713, 4294901760
    %715 = vmatpush1.msra.mxu0 %v714
    %716 = vmatprep.subr.mxu0 0.0
    %v717 = vand.u32 %v560, 4294901760
    %v718 = vsub.f32 %v560, %v717
    %v719 = vand.u32 %v718, 4294901760
    %v720 = vsub.f32 %v718, %v719
    %v721 = vand.u32 %v720, 4294901760
    %722 = vmatpush1.msra.mxu0 %v721
    %723 = vmatprep.subr.mxu0 0.0
    %v724 = vand.u32 %v561, 4294901760
    %v725 = vsub.f32 %v561, %v724
    %v726 = vand.u32 %v725, 4294901760
    %v727 = vsub.f32 %v725, %v726
    %v728 = vand.u32 %v727, 4294901760
    %729 = vmatpush1.msra.mxu0 %v728
    %730 = vmatprep.subr.mxu0 0.0
    %v731 = vand.u32 %v562, 4294901760
    %v732 = vsub.f32 %v562, %v731
    %v733 = vand.u32 %v732, 4294901760
    %v734 = vsub.f32 %v732, %v733
    %v735 = vand.u32 %v734, 4294901760
    %736 = vmatpush1.msra.mxu0 %v735
    %737 = vmatprep.subr.mxu0 0.0
    %v738 = vand.u32 %v563, 4294901760
    %v739 = vsub.f32 %v563, %v738
    %v740 = vand.u32 %v739, 4294901760
    %v741 = vsub.f32 %v739, %v740
    %v742 = vand.u32 %v741, 4294901760
    %743 = vmatpush1.msra.mxu0 %v742
    %744 = vmatprep.subr.mxu0 0.0
    %v745 = vand.u32 %v564, 4294901760
    %v746 = vsub.f32 %v564, %v745
    %v747 = vand.u32 %v746, 4294901760
    %v748 = vsub.f32 %v746, %v747
    %v749 = vand.u32 %v748, 4294901760
    %750 = vmatpush1.msra.mxu0 %v749
    %751 = vmatprep.subr.mxu0 0.0
    %v752 = vand.u32 %v565, 4294901760
    %v753 = vsub.f32 %v565, %v752
    %v754 = vand.u32 %v753, 4294901760
    %v755 = vsub.f32 %v753, %v754
    %v756 = vand.u32 %v755, 4294901760
    %757 = vmatpush1.msra.mxu0 %v756
    %758 = vmatprep.subr.mxu0 0.0
    %v759 = vand.u32 %v566, 4294901760
    %v760 = vsub.f32 %v566, %v759
    %v761 = vand.u32 %v760, 4294901760
    %v762 = vsub.f32 %v760, %v761
    %v763 = vand.u32 %v762, 4294901760
    %764 = vmatpush1.msra.mxu0 %v763
    %765 = vmatprep.subr.mxu0 0.0
    %v766 = vand.u32 %v567, 4294901760
    %v767 = vsub.f32 %v567, %v766
    %v768 = vand.u32 %v767, 4294901760
    %v769 = vsub.f32 %v767, %v768
    %v770 = vand.u32 %v769, 4294901760
    %771 = vmatpush1.msra.mxu0 %v770
    %772 = vmatprep.subr.mxu0 0.0
    %v773 = vand.u32 %v568, 4294901760
    %v774 = vsub.f32 %v568, %v773
    %v775 = vand.u32 %v774, 4294901760
    %v776 = vsub.f32 %v774, %v775
    %v777 = vand.u32 %v776, 4294901760
    %778 = vmatpush1.msra.mxu0 %v777
    %779 = vmatprep.subr.mxu0 0.0
    %780 = vmatpush1.msra.mxu0 0.0
    %781 = vmatprep.subr.mxu0 0.0
    %782 = vmatpush1.msra.mxu0 0.0
    %783 = vmatprep.subr.mxu0 0.0
    %784 = vmatpush1.msra.mxu0 0.0
    %785 = vmatprep.subr.mxu0 0.0
    %786 = vmatpush1.msra.mxu0 0.0
    %787 = vmatprep.subr.mxu0 0.0
    %788 = vmatpush1.msra.mxu0 0.0
    %789 = vmatprep.subr.mxu0 0.0
    %790 = vmatpush1.msra.mxu0 0.0
    %791 = vmatprep.subr.mxu0 0.0
    %792 = vmatpush1.msra.mxu0 0.0
    %793 = vmatprep.subr.mxu0 0.0
    %794 = vmatpush1.msra.mxu0 0.0
    %795 = vmatprep.subr.mxu0 0.0
    %796 = vmatpush1.msra.mxu0 0.0
    %797 = vmatprep.subr.mxu0 0.0
    %798 = vmatpush1.msra.mxu0 0.0
    %799 = vmatprep.subr.mxu0 0.0
    %800 = vmatpush1.msra.mxu0 0.0
    %801 = vmatprep.subr.mxu0 0.0
    %802 = vmatpush1.msra.mxu0 0.0
    %803 = vmatprep.subr.mxu0 0.0
    %804 = vmatpush1.msra.mxu0 0.0
    %805 = vmatprep.subr.mxu0 0.0
    %806 = vmatpush1.msra.mxu0 0.0
    %807 = vmatprep.subr.mxu0 0.0
    %808 = vmatpush1.msra.mxu0 0.0
    %809 = vmatprep.subr.mxu0 0.0
    %810 = vmatpush1.msra.mxu0 0.0
    %811 = vmatprep.mubr.f32.mxu0 0.0
    %v812 = vand.u32 %v552, 4294901760
    %813 = vmatmul.mubr.f32.gmra.mrb[0].mxu0 %v812
    %v814 = vpop.f32.mrb[0].mxu0
    %v815 = vadd.f32 %v664, %v814
    %v816 = vpop.f32.mrb[0].mxu0
    %817 = vdwg.mxu0
    %818 = vmatprep.subr.mxu0 0.0
    %v819 = vand.u32 %v553, 4294901760
    %v820 = vsub.f32 %v553, %v819
    %821 = vmatpush1.msra.mxu0 %v820
    %822 = vmatprep.subr.mxu0 0.0
    %v823 = vand.u32 %v554, 4294901760
    %v824 = vsub.f32 %v554, %v823
    %825 = vmatpush1.msra.mxu0 %v824
    %826 = vmatprep.subr.mxu0 0.0
    %v827 = vand.u32 %v555, 4294901760
    %v828 = vsub.f32 %v555, %v827
    %829 = vmatpush1.msra.mxu0 %v828
    %830 = vmatprep.subr.mxu0 0.0
    %v831 = vand.u32 %v556, 4294901760
    %v832 = vsub.f32 %v556, %v831
    %833 = vmatpush1.msra.mxu0 %v832
    %834 = vmatprep.subr.mxu0 0.0
    %v835 = vand.u32 %v557, 4294901760
    %v836 = vsub.f32 %v557, %v835
    %837 = vmatpush1.msra.mxu0 %v836
    %838 = vmatprep.subr.mxu0 0.0
    %v839 = vand.u32 %v558, 4294901760
    %v840 = vsub.f32 %v558, %v839
    %841 = vmatpush1.msra.mxu0 %v840
    %842 = vmatprep.subr.mxu0 0.0
    %v843 = vand.u32 %v559, 4294901760
    %v844 = vsub.f32 %v559, %v843
    %845 = vmatpush1.msra.mxu0 %v844
    %846 = vmatprep.subr.mxu0 0.0
    %v847 = vand.u32 %v560, 4294901760
    %v848 = vsub.f32 %v560, %v847
    %849 = vmatpush1.msra.mxu0 %v848
    %850 = vmatprep.subr.mxu0 0.0
    %v851 = vand.u32 %v561, 4294901760
    %v852 = vsub.f32 %v561, %v851
    %853 = vmatpush1.msra.mxu0 %v852
    %854 = vmatprep.subr.mxu0 0.0
    %v855 = vand.u32 %v562, 4294901760
    %v856 = vsub.f32 %v562, %v855
    %857 = vmatpush1.msra.mxu0 %v856
    %858 = vmatprep.subr.mxu0 0.0
    %v859 = vand.u32 %v563, 4294901760
    %v860 = vsub.f32 %v563, %v859
    %861 = vmatpush1.msra.mxu0 %v860
    %862 = vmatprep.subr.mxu0 0.0
    %v863 = vand.u32 %v564, 4294901760
    %v864 = vsub.f32 %v564, %v863
    %865 = vmatpush1.msra.mxu0 %v864
    %866 = vmatprep.subr.mxu0 0.0
    %v867 = vand.u32 %v565, 4294901760
    %v868 = vsub.f32 %v565, %v867
    %869 = vmatpush1.msra.mxu0 %v868
    %870 = vmatprep.subr.mxu0 0.0
    %v871 = vand.u32 %v566, 4294901760
    %v872 = vsub.f32 %v566, %v871
    %873 = vmatpush1.msra.mxu0 %v872
    %874 = vmatprep.subr.mxu0 0.0
    %v875 = vand.u32 %v567, 4294901760
    %v876 = vsub.f32 %v567, %v875
    %877 = vmatpush1.msra.mxu0 %v876
    %878 = vmatprep.subr.mxu0 0.0
    %v879 = vand.u32 %v568, 4294901760
    %v880 = vsub.f32 %v568, %v879
    %881 = vmatpush1.msra.mxu0 %v880
    %882 = vmatprep.subr.mxu0 0.0
    %883 = vmatpush1.msra.mxu0 0.0
    %884 = vmatprep.subr.mxu0 0.0
    %885 = vmatpush1.msra.mxu0 0.0
    %886 = vmatprep.subr.mxu0 0.0
    %887 = vmatpush1.msra.mxu0 0.0
    %888 = vmatprep.subr.mxu0 0.0
    %889 = vmatpush1.msra.mxu0 0.0
    %890 = vmatprep.subr.mxu0 0.0
    %891 = vmatpush1.msra.mxu0 0.0
    %892 = vmatprep.subr.mxu0 0.0
    %893 = vmatpush1.msra.mxu0 0.0
    %894 = vmatprep.subr.mxu0 0.0
    %895 = vmatpush1.msra.mxu0 0.0
    %896 = vmatprep.subr.mxu0 0.0
    %897 = vmatpush1.msra.mxu0 0.0
    %898 = vmatprep.subr.mxu0 0.0
    %899 = vmatpush1.msra.mxu0 0.0
    %900 = vmatprep.subr.mxu0 0.0
    %901 = vmatpush1.msra.mxu0 0.0
    %902 = vmatprep.subr.mxu0 0.0
    %903 = vmatpush1.msra.mxu0 0.0
    %904 = vmatprep.subr.mxu0 0.0
    %905 = vmatpush1.msra.mxu0 0.0
    %906 = vmatprep.subr.mxu0 0.0
    %907 = vmatpush1.msra.mxu0 0.0
    %908 = vmatprep.subr.mxu0 0.0
    %909 = vmatpush1.msra.mxu0 0.0
    %910 = vmatprep.subr.mxu0 0.0
    %911 = vmatpush1.msra.mxu0 0.0
    %912 = vmatprep.subr.mxu0 0.0
    %913 = vmatpush1.msra.mxu0 0.0
    %914 = vmatprep.mubr.f32.mxu0 0.0
    %v915 = vand.u32 %v552, 4294901760
    %v916 = vsub.f32 %v552, %v915
    %917 = vmatmul.mubr.f32.gmra.mrb[0].mxu0 %v916
    %v918 = vpop.f32.mrb[0].mxu0
    %v919 = vadd.f32 %v815, %v918
    %v920 = vpop.f32.mrb[0].mxu0
    %921 = vdwg.mxu0
    %922 = vmatprep.subr.mxu0 0.0
    %v923 = vand.u32 %v553, 4294901760
    %924 = vmatpush1.msra.mxu0 %v923
    %925 = vmatprep.subr.mxu0 0.0
    %v926 = vand.u32 %v554, 4294901760
    %927 = vmatpush1.msra.mxu0 %v926
    %928 = vmatprep.subr.mxu0 0.0
    %v929 = vand.u32 %v555, 4294901760
    %930 = vmatpush1.msra.mxu0 %v929
    %931 = vmatprep.subr.mxu0 0.0
    %v932 = vand.u32 %v556, 4294901760
    %933 = vmatpush1.msra.mxu0 %v932
    %934 = vmatprep.subr.mxu0 0.0
    %v935 = vand.u32 %v557, 4294901760
    %936 = vmatpush1.msra.mxu0 %v935
    %937 = vmatprep.subr.mxu0 0.0
    %v938 = vand.u32 %v558, 4294901760
    %939 = vmatpush1.msra.mxu0 %v938
    %940 = vmatprep.subr.mxu0 0.0
    %v941 = vand.u32 %v559, 4294901760
    %942 = vmatpush1.msra.mxu0 %v941
    %943 = vmatprep.subr.mxu0 0.0
    %v944 = vand.u32 %v560, 4294901760
    %945 = vmatpush1.msra.mxu0 %v944
    %946 = vmatprep.subr.mxu0 0.0
    %v947 = vand.u32 %v561, 4294901760
    %948 = vmatpush1.msra.mxu0 %v947
    %949 = vmatprep.subr.mxu0 0.0
    %v950 = vand.u32 %v562, 4294901760
    %951 = vmatpush1.msra.mxu0 %v950
    %952 = vmatprep.subr.mxu0 0.0
    %v953 = vand.u32 %v563, 4294901760
    %954 = vmatpush1.msra.mxu0 %v953
    %955 = vmatprep.subr.mxu0 0.0
    %v956 = vand.u32 %v564, 4294901760
    %957 = vmatpush1.msra.mxu0 %v956
    %958 = vmatprep.subr.mxu0 0.0
    %v959 = vand.u32 %v565, 4294901760
    %960 = vmatpush1.msra.mxu0 %v959
    %961 = vmatprep.subr.mxu0 0.0
    %v962 = vand.u32 %v566, 4294901760
    %963 = vmatpush1.msra.mxu0 %v962
    %964 = vmatprep.subr.mxu0 0.0
    %v965 = vand.u32 %v567, 4294901760
    %966 = vmatpush1.msra.mxu0 %v965
    %967 = vmatprep.subr.mxu0 0.0
    %v968 = vand.u32 %v568, 4294901760
    %969 = vmatpush1.msra.mxu0 %v968
    %970 = vmatprep.subr.mxu0 0.0
    %971 = vmatpush1.msra.mxu0 0.0
    %972 = vmatprep.subr.mxu0 0.0
    %973 = vmatpush1.msra.mxu0 0.0
    %974 = vmatprep.subr.mxu0 0.0
    %975 = vmatpush1.msra.mxu0 0.0
    %976 = vmatprep.subr.mxu0 0.0
    %977 = vmatpush1.msra.mxu0 0.0
    %978 = vmatprep.subr.mxu0 0.0
    %979 = vmatpush1.msra.mxu0 0.0
    %980 = vmatprep.subr.mxu0 0.0
    %981 = vmatpush1.msra.mxu0 0.0
    %982 = vmatprep.subr.mxu0 0.0
    %983 = vmatpush1.msra.mxu0 0.0
    %984 = vmatprep.subr.mxu0 0.0
    %985 = vmatpush1.msra.mxu0 0.0
    %986 = vmatprep.subr.mxu0 0.0
    %987 = vmatpush1.msra.mxu0 0.0
    %988 = vmatprep.subr.mxu0 0.0
    %989 = vmatpush1.msra.mxu0 0.0
    %990 = vmatprep.subr.mxu0 0.0
    %991 = vmatpush1.msra.mxu0 0.0
    %992 = vmatprep.subr.mxu0 0.0
    %993 = vmatpush1.msra.mxu0 0.0
    %994 = vmatprep.subr.mxu0 0.0
    %995 = vmatpush1.msra.mxu0 0.0
    %996 = vmatprep.subr.mxu0 0.0
    %997 = vmatpush1.msra.mxu0 0.0
    %998 = vmatprep.subr.mxu0 0.0
    %999 = vmatpush1.msra.mxu0 0.0
    %1000 = vmatprep.subr.mxu0 0.0
    %1001 = vmatpush1.msra.mxu0 0.0
    %1002 = vmatprep.mubr.f32.mxu0 0.0
    %v1003 = vand.u32 %v552, 4294901760
    %v1004 = vsub.f32 %v552, %v1003
    %v1005 = vand.u32 %v1004, 4294901760
    %1006 = vmatmul.mubr.f32.gmra.mrb[0].mxu0 %v1005
    %v1007 = vpop.f32.mrb[0].mxu0
    %v1008 = vadd.f32 %v919, %v1007
    %v1009 = vpop.f32.mrb[0].mxu0
    %1010 = vdwg.mxu0
    %1011 = vmatprep.subr.mxu0 0.0
    %v1012 = vand.u32 %v553, 4294901760
    %v1013 = vsub.f32 %v553, %v1012
    %v1014 = vand.u32 %v1013, 4294901760
    %1015 = vmatpush1.msra.mxu0 %v1014
    %1016 = vmatprep.subr.mxu0 0.0
    %v1017 = vand.u32 %v554, 4294901760
    %v1018 = vsub.f32 %v554, %v1017
    %v1019 = vand.u32 %v1018, 4294901760
    %1020 = vmatpush1.msra.mxu0 %v1019
    %1021 = vmatprep.subr.mxu0 0.0
    %v1022 = vand.u32 %v555, 4294901760
    %v1023 = vsub.f32 %v555, %v1022
    %v1024 = vand.u32 %v1023, 4294901760
    %1025 = vmatpush1.msra.mxu0 %v1024
    %1026 = vmatprep.subr.mxu0 0.0
    %v1027 = vand.u32 %v556, 4294901760
    %v1028 = vsub.f32 %v556, %v1027
    %v1029 = vand.u32 %v1028, 4294901760
    %1030 = vmatpush1.msra.mxu0 %v1029
    %1031 = vmatprep.subr.mxu0 0.0
    %v1032 = vand.u32 %v557, 4294901760
    %v1033 = vsub.f32 %v557, %v1032
    %v1034 = vand.u32 %v1033, 4294901760
    %1035 = vmatpush1.msra.mxu0 %v1034
    %1036 = vmatprep.subr.mxu0 0.0
    %v1037 = vand.u32 %v558, 4294901760
    %v1038 = vsub.f32 %v558, %v1037
    %v1039 = vand.u32 %v1038, 4294901760
    %1040 = vmatpush1.msra.mxu0 %v1039
    %1041 = vmatprep.subr.mxu0 0.0
    %v1042 = vand.u32 %v559, 4294901760
    %v1043 = vsub.f32 %v559, %v1042
    %v1044 = vand.u32 %v1043, 4294901760
    %1045 = vmatpush1.msra.mxu0 %v1044
    %1046 = vmatprep.subr.mxu0 0.0
    %v1047 = vand.u32 %v560, 4294901760
    %v1048 = vsub.f32 %v560, %v1047
    %v1049 = vand.u32 %v1048, 4294901760
    %1050 = vmatpush1.msra.mxu0 %v1049
    %1051 = vmatprep.subr.mxu0 0.0
    %v1052 = vand.u32 %v561, 4294901760
    %v1053 = vsub.f32 %v561, %v1052
    %v1054 = vand.u32 %v1053, 4294901760
    %1055 = vmatpush1.msra.mxu0 %v1054
    %1056 = vmatprep.subr.mxu0 0.0
    %v1057 = vand.u32 %v562, 4294901760
    %v1058 = vsub.f32 %v562, %v1057
    %v1059 = vand.u32 %v1058, 4294901760
    %1060 = vmatpush1.msra.mxu0 %v1059
    %1061 = vmatprep.subr.mxu0 0.0
    %v1062 = vand.u32 %v563, 4294901760
    %v1063 = vsub.f32 %v563, %v1062
    %v1064 = vand.u32 %v1063, 4294901760
    %1065 = vmatpush1.msra.mxu0 %v1064
    %1066 = vmatprep.subr.mxu0 0.0
    %v1067 = vand.u32 %v564, 4294901760
    %v1068 = vsub.f32 %v564, %v1067
    %v1069 = vand.u32 %v1068, 4294901760
    %1070 = vmatpush1.msra.mxu0 %v1069
    %1071 = vmatprep.subr.mxu0 0.0
    %v1072 = vand.u32 %v565, 4294901760
    %v1073 = vsub.f32 %v565, %v1072
    %v1074 = vand.u32 %v1073, 4294901760
    %1075 = vmatpush1.msra.mxu0 %v1074
    %1076 = vmatprep.subr.mxu0 0.0
    %v1077 = vand.u32 %v566, 4294901760
    %v1078 = vsub.f32 %v566, %v1077
    %v1079 = vand.u32 %v1078, 4294901760
    %1080 = vmatpush1.msra.mxu0 %v1079
    %1081 = vmatprep.subr.mxu0 0.0
    %v1082 = vand.u32 %v567, 4294901760
    %v1083 = vsub.f32 %v567, %v1082
    %v1084 = vand.u32 %v1083, 4294901760
    %1085 = vmatpush1.msra.mxu0 %v1084
    %1086 = vmatprep.subr.mxu0 0.0
    %v1087 = vand.u32 %v568, 4294901760
    %v1088 = vsub.f32 %v568, %v1087
    %v1089 = vand.u32 %v1088, 4294901760
    %1090 = vmatpush1.msra.mxu0 %v1089
    %1091 = vmatprep.subr.mxu0 0.0
    %1092 = vmatpush1.msra.mxu0 0.0
    %1093 = vmatprep.subr.mxu0 0.0
    %1094 = vmatpush1.msra.mxu0 0.0
    %1095 = vmatprep.subr.mxu0 0.0
    %1096 = vmatpush1.msra.mxu0 0.0
    %1097 = vmatprep.subr.mxu0 0.0
    %1098 = vmatpush1.msra.mxu0 0.0
    %1099 = vmatprep.subr.mxu0 0.0
    %1100 = vmatpush1.msra.mxu0 0.0
    %1101 = vmatprep.subr.mxu0 0.0
    %1102 = vmatpush1.msra.mxu0 0.0
    %1103 = vmatprep.subr.mxu0 0.0
    %1104 = vmatpush1.msra.mxu0 0.0
    %1105 = vmatprep.subr.mxu0 0.0
    %1106 = vmatpush1.msra.mxu0 0.0
    %1107 = vmatprep.subr.mxu0 0.0
    %1108 = vmatpush1.msra.mxu0 0.0
    %1109 = vmatprep.subr.mxu0 0.0
    %1110 = vmatpush1.msra.mxu0 0.0
    %1111 = vmatprep.subr.mxu0 0.0
    %1112 = vmatpush1.msra.mxu0 0.0
    %1113 = vmatprep.subr.mxu0 0.0
    %1114 = vmatpush1.msra.mxu0 0.0
    %1115 = vmatprep.subr.mxu0 0.0
    %1116 = vmatpush1.msra.mxu0 0.0
    %1117 = vmatprep.subr.mxu0 0.0
    %1118 = vmatpush1.msra.mxu0 0.0
    %1119 = vmatprep.subr.mxu0 0.0
    %1120 = vmatpush1.msra.mxu0 0.0
    %1121 = vmatprep.subr.mxu0 0.0
    %1122 = vmatpush1.msra.mxu0 0.0
    %1123 = vmatprep.mubr.f32.mxu0 0.0
    %v1124 = vand.u32 %v552, 4294901760
    %1125 = vmatmul.mubr.f32.gmra.mrb[0].mxu0 %v1124
    %v1126 = vpop.f32.mrb[0].mxu0
    %v1127 = vadd.f32 %v1008, %v1126
    %v1128 = vpop.f32.mrb[0].mxu0
    %1129 = vdwg.mxu0
    %1130 = vmatprep.subr.mxu0 0.0
    %v1131 = vand.u32 %v553, 4294901760
    %1132 = vmatpush1.msra.mxu0 %v1131
    %1133 = vmatprep.subr.mxu0 0.0
    %v1134 = vand.u32 %v554, 4294901760
    %1135 = vmatpush1.msra.mxu0 %v1134
    %1136 = vmatprep.subr.mxu0 0.0
    %v1137 = vand.u32 %v555, 4294901760
    %1138 = vmatpush1.msra.mxu0 %v1137
    %1139 = vmatprep.subr.mxu0 0.0
    %v1140 = vand.u32 %v556, 4294901760
    %1141 = vmatpush1.msra.mxu0 %v1140
    %1142 = vmatprep.subr.mxu0 0.0
    %v1143 = vand.u32 %v557, 4294901760
    %1144 = vmatpush1.msra.mxu0 %v1143
    %1145 = vmatprep.subr.mxu0 0.0
    %v1146 = vand.u32 %v558, 4294901760
    %1147 = vmatpush1.msra.mxu0 %v1146
    %1148 = vmatprep.subr.mxu0 0.0
    %v1149 = vand.u32 %v559, 4294901760
    %1150 = vmatpush1.msra.mxu0 %v1149
    %1151 = vmatprep.subr.mxu0 0.0
    %v1152 = vand.u32 %v560, 4294901760
    %1153 = vmatpush1.msra.mxu0 %v1152
    %1154 = vmatprep.subr.mxu0 0.0
    %v1155 = vand.u32 %v561, 4294901760
    %1156 = vmatpush1.msra.mxu0 %v1155
    %1157 = vmatprep.subr.mxu0 0.0
    %v1158 = vand.u32 %v562, 4294901760
    %1159 = vmatpush1.msra.mxu0 %v1158
    %1160 = vmatprep.subr.mxu0 0.0
    %v1161 = vand.u32 %v563, 4294901760
    %1162 = vmatpush1.msra.mxu0 %v1161
    %1163 = vmatprep.subr.mxu0 0.0
    %v1164 = vand.u32 %v564, 4294901760
    %1165 = vmatpush1.msra.mxu0 %v1164
    %1166 = vmatprep.subr.mxu0 0.0
    %v1167 = vand.u32 %v565, 4294901760
    %1168 = vmatpush1.msra.mxu0 %v1167
    %1169 = vmatprep.subr.mxu0 0.0
    %v1170 = vand.u32 %v566, 4294901760
    %1171 = vmatpush1.msra.mxu0 %v1170
    %1172 = vmatprep.subr.mxu0 0.0
    %v1173 = vand.u32 %v567, 4294901760
    %1174 = vmatpush1.msra.mxu0 %v1173
    %1175 = vmatprep.subr.mxu0 0.0
    %v1176 = vand.u32 %v568, 4294901760
    %1177 = vmatpush1.msra.mxu0 %v1176
    %1178 = vmatprep.subr.mxu0 0.0
    %1179 = vmatpush1.msra.mxu0 0.0
    %1180 = vmatprep.subr.mxu0 0.0
    %1181 = vmatpush1.msra.mxu0 0.0
    %1182 = vmatprep.subr.mxu0 0.0
    %1183 = vmatpush1.msra.mxu0 0.0
    %1184 = vmatprep.subr.mxu0 0.0
    %1185 = vmatpush1.msra.mxu0 0.0
    %1186 = vmatprep.subr.mxu0 0.0
    %1187 = vmatpush1.msra.mxu0 0.0
    %1188 = vmatprep.subr.mxu0 0.0
    %1189 = vmatpush1.msra.mxu0 0.0
    %1190 = vmatprep.subr.mxu0 0.0
    %1191 = vmatpush1.msra.mxu0 0.0
    %1192 = vmatprep.subr.mxu0 0.0
    %1193 = vmatpush1.msra.mxu0 0.0
    %1194 = vmatprep.subr.mxu0 0.0
    %1195 = vmatpush1.msra.mxu0 0.0
    %1196 = vmatprep.subr.mxu0 0.0
    %1197 = vmatpush1.msra.mxu0 0.0
    %1198 = vmatprep.subr.mxu0 0.0
    %1199 = vmatpush1.msra.mxu0 0.0
    %1200 = vmatprep.subr.mxu0 0.0
    %1201 = vmatpush1.msra.mxu0 0.0
    %1202 = vmatprep.subr.mxu0 0.0
    %1203 = vmatpush1.msra.mxu0 0.0
    %1204 = vmatprep.subr.mxu0 0.0
    %1205 = vmatpush1.msra.mxu0 0.0
    %1206 = vmatprep.subr.mxu0 0.0
    %1207 = vmatpush1.msra.mxu0 0.0
    %1208 = vmatprep.subr.mxu0 0.0
    %1209 = vmatpush1.msra.mxu0 0.0
    %1210 = vmatprep.mubr.f32.mxu0 0.0
    %v1211 = vand.u32 %v552, 4294901760
    %1212 = vmatmul.mubr.f32.gmra.mrb[0].mxu0 %v1211
    %v1213 = vpop.f32.mrb[0].mxu0
    %v1214 = vadd.f32 %v1127, %v1213
    %v1215 = vpop.f32.mrb[0].mxu0
    %1216 = vdwg.mxu0
    %v1217 = vmax.f32 %v1214, 0.0
    %v1218 = vld [vmem:[#allocation7] sm:$0xff]
    %v1219 = vld [vmem:[#allocation7 + $0x8] sm:$0xff]
    %v1220 = vld [vmem:[#allocation7 + $0x10] sm:$0xff]
    %v1221 = vld [vmem:[#allocation7 + $0x18] sm:$0xff]
    %v1222 = vld [vmem:[#allocation7 + $0x20] sm:$0xff]
    %v1223 = vld [vmem:[#allocation7 + $0x28] sm:$0xff]
    %v1224 = vld [vmem:[#allocation7 + $0x30] sm:$0xff]
    %v1225 = vld [vmem:[#allocation7 + $0x38] sm:$0xff]
    %v1226 = vld [vmem:[#allocation7 + $0x40] sm:$0xff]
    %v1227 = vld [vmem:[#allocation7 + $0x48] sm:$0xff]
    %v1228 = vld [vmem:[#allocation7 + $0x50] sm:$0xff]
    %v1229 = vld [vmem:[#allocation7 + $0x58] sm:$0xff]
    %v1230 = vld [vmem:[#allocation7 + $0x60] sm:$0xff]
    %v1231 = vld [vmem:[#allocation7 + $0x68] sm:$0xff]
    %v1232 = vld [vmem:[#allocation7 + $0x70] sm:$0xff]
    %v1233 = vld [vmem:[#allocation7 + $0x78] sm:$0xff]
    %v1234 = vld [vmem:[%s6] sm:$0x1]
    %v1236 = vlaneseq
    %v1237 = vshrl.u32 %v1236, 7
    %v1238 = vsub.s32 0, %v1237
    %v1239 = vrot.slane %v1234, %v1238
    %1241 = vmatprep.subr.mxu0 0.0
    %v1242 = vand.u32 %v1218, 4294901760
    %1243 = vmatpush1.msra.mxu0 %v1242
    %1244 = vmatprep.subr.mxu0 0.0
    %v1245 = vand.u32 %v1219, 4294901760
    %1246 = vmatpush1.msra.mxu0 %v1245
    %1247 = vmatprep.subr.mxu0 0.0
    %v1248 = vand.u32 %v1220, 4294901760
    %1249 = vmatpush1.msra.mxu0 %v1248
    %1250 = vmatprep.subr.mxu0 0.0
    %v1251 = vand.u32 %v1221, 4294901760
    %1252 = vmatpush1.msra.mxu0 %v1251
    %1253 = vmatprep.subr.mxu0 0.0
    %v1254 = vand.u32 %v1222, 4294901760
    %1255 = vmatpush1.msra.mxu0 %v1254
    %1256 = vmatprep.subr.mxu0 0.0
    %v1257 = vand.u32 %v1223, 4294901760
    %1258 = vmatpush1.msra.mxu0 %v1257
    %1259 = vmatprep.subr.mxu0 0.0
    %v1260 = vand.u32 %v1224, 4294901760
    %1261 = vmatpush1.msra.mxu0 %v1260
    %1262 = vmatprep.subr.mxu0 0.0
    %v1263 = vand.u32 %v1225, 4294901760
    %1264 = vmatpush1.msra.mxu0 %v1263
    %1265 = vmatprep.subr.mxu0 0.0
    %v1266 = vand.u32 %v1226, 4294901760
    %1267 = vmatpush1.msra.mxu0 %v1266
    %1268 = vmatprep.subr.mxu0 0.0
    %v1269 = vand.u32 %v1227, 4294901760
    %1270 = vmatpush1.msra.mxu0 %v1269
    %1271 = vmatprep.subr.mxu0 0.0
    %v1272 = vand.u32 %v1228, 4294901760
    %1273 = vmatpush1.msra.mxu0 %v1272
    %1274 = vmatprep.subr.mxu0 0.0
    %v1275 = vand.u32 %v1229, 4294901760
    %1276 = vmatpush1.msra.mxu0 %v1275
    %1277 = vmatprep.subr.mxu0 0.0
    %v1278 = vand.u32 %v1230, 4294901760
    %1279 = vmatpush1.msra.mxu0 %v1278
    %1280 = vmatprep.subr.mxu0 0.0
    %v1281 = vand.u32 %v1231, 4294901760
    %1282 = vmatpush1.msra.mxu0 %v1281
    %1283 = vmatprep.subr.mxu0 0.0
    %v1284 = vand.u32 %v1232, 4294901760
    %1285 = vmatpush1.msra.mxu0 %v1284
    %1286 = vmatprep.subr.mxu0 0.0
    %v1287 = vand.u32 %v1233, 4294901760
    %1288 = vmatpush1.msra.mxu0 %v1287
    %1289 = vmatprep.subr.mxu0 0.0
    %1290 = vmatpush1.msra.mxu0 0.0
    %1291 = vmatprep.subr.mxu0 0.0
    %1292 = vmatpush1.msra.mxu0 0.0
    %1293 = vmatprep.subr.mxu0 0.0
    %1294 = vmatpush1.msra.mxu0 0.0
    %1295 = vmatprep.subr.mxu0 0.0
    %1296 = vmatpush1.msra.mxu0 0.0
    %1297 = vmatprep.subr.mxu0 0.0
    %1298 = vmatpush1.msra.mxu0 0.0
    %1299 = vmatprep.subr.mxu0 0.0
    %1300 = vmatpush1.msra.mxu0 0.0
    %1301 = vmatprep.subr.mxu0 0.0
    %1302 = vmatpush1.msra.mxu0 0.0
    %1303 = vmatprep.subr.mxu0 0.0
    %1304 = vmatpush1.msra.mxu0 0.0
    %1305 = vmatprep.subr.mxu0 0.0
    %1306 = vmatpush1.msra.mxu0 0.0
    %1307 = vmatprep.subr.mxu0 0.0
    %1308 = vmatpush1.msra.mxu0 0.0
    %1309 = vmatprep.subr.mxu0 0.0
    %1310 = vmatpush1.msra.mxu0 0.0
    %1311 = vmatprep.subr.mxu0 0.0
    %1312 = vmatpush1.msra.mxu0 0.0
    %1313 = vmatprep.subr.mxu0 0.0
    %1314 = vmatpush1.msra.mxu0 0.0
    %1315 = vmatprep.subr.mxu0 0.0
    %1316 = vmatpush1.msra.mxu0 0.0
    %1317 = vmatprep.subr.mxu0 0.0
    %1318 = vmatpush1.msra.mxu0 0.0
    %1319 = vmatprep.subr.mxu0 0.0
    %1320 = vmatpush1.msra.mxu0 0.0
    %1321 = vmatprep.mubr.f32.mxu0 0.0
    %v1322 = vand.u32 %v1217, 4294901760
    %v1323 = vsub.f32 %v1217, %v1322
    %v1324 = vand.u32 %v1323, 4294901760
    %v1325 = vsub.f32 %v1323, %v1324
    %v1326 = vand.u32 %v1325, 4294901760
    %1327 = vmatmul.mubr.f32.gmra.mrb[0].mxu0 %v1326
    %v1328 = vpop.f32.mrb[0].mxu0
    %v1329 = vadd.f32 %v1239, %v1328
    %v1330 = vpop.f32.mrb[0].mxu0
    %1331 = vdwg.mxu0
    %1332 = vmatprep.subr.mxu0 0.0
    %v1333 = vand.u32 %v1218, 4294901760
    %v1334 = vsub.f32 %v1218, %v1333
    %v1335 = vand.u32 %v1334, 4294901760
    %v1336 = vsub.f32 %v1334, %v1335
    %v1337 = vand.u32 %v1336, 4294901760
    %1338 = vmatpush1.msra.mxu0 %v1337
    %1339 = vmatprep.subr.mxu0 0.0
    %v1340 = vand.u32 %v1219, 4294901760
    %v1341 = vsub.f32 %v1219, %v1340
    %v1342 = vand.u32 %v1341, 4294901760
    %v1343 = vsub.f32 %v1341, %v1342
    %v1344 = vand.u32 %v1343, 4294901760
    %1345 = vmatpush1.msra.mxu0 %v1344
    %1346 = vmatprep.subr.mxu0 0.0
    %v1347 = vand.u32 %v1220, 4294901760
    %v1348 = vsub.f32 %v1220, %v1347
    %v1349 = vand.u32 %v1348, 4294901760
    %v1350 = vsub.f32 %v1348, %v1349
    %v1351 = vand.u32 %v1350, 4294901760
    %1352 = vmatpush1.msra.mxu0 %v1351
    %1353 = vmatprep.subr.mxu0 0.0
    %v1354 = vand.u32 %v1221, 4294901760
    %v1355 = vsub.f32 %v1221, %v1354
    %v1356 = vand.u32 %v1355, 4294901760
    %v1357 = vsub.f32 %v1355, %v1356
    %v1358 = vand.u32 %v1357, 4294901760
    %1359 = vmatpush1.msra.mxu0 %v1358
    %1360 = vmatprep.subr.mxu0 0.0
    %v1361 = vand.u32 %v1222, 4294901760
    %v1362 = vsub.f32 %v1222, %v1361
    %v1363 = vand.u32 %v1362, 4294901760
    %v1364 = vsub.f32 %v1362, %v1363
    %v1365 = vand.u32 %v1364, 4294901760
    %1366 = vmatpush1.msra.mxu0 %v1365
    %1367 = vmatprep.subr.mxu0 0.0
    %v1368 = vand.u32 %v1223, 4294901760
    %v1369 = vsub.f32 %v1223, %v1368
    %v1370 = vand.u32 %v1369, 4294901760
    %v1371 = vsub.f32 %v1369, %v1370
    %v1372 = vand.u32 %v1371, 4294901760
    %1373 = vmatpush1.msra.mxu0 %v1372
    %1374 = vmatprep.subr.mxu0 0.0
    %v1375 = vand.u32 %v1224, 4294901760
    %v1376 = vsub.f32 %v1224, %v1375
    %v1377 = vand.u32 %v1376, 4294901760
    %v1378 = vsub.f32 %v1376, %v1377
    %v1379 = vand.u32 %v1378, 4294901760
    %1380 = vmatpush1.msra.mxu0 %v1379
    %1381 = vmatprep.subr.mxu0 0.0
    %v1382 = vand.u32 %v1225, 4294901760
    %v1383 = vsub.f32 %v1225, %v1382
    %v1384 = vand.u32 %v1383, 4294901760
    %v1385 = vsub.f32 %v1383, %v1384
    %v1386 = vand.u32 %v1385, 4294901760
    %1387 = vmatpush1.msra.mxu0 %v1386
    %1388 = vmatprep.subr.mxu0 0.0
    %v1389 = vand.u32 %v1226, 4294901760
    %v1390 = vsub.f32 %v1226, %v1389
    %v1391 = vand.u32 %v1390, 4294901760
    %v1392 = vsub.f32 %v1390, %v1391
    %v1393 = vand.u32 %v1392, 4294901760
    %1394 = vmatpush1.msra.mxu0 %v1393
    %1395 = vmatprep.subr.mxu0 0.0
    %v1396 = vand.u32 %v1227, 4294901760
    %v1397 = vsub.f32 %v1227, %v1396
    %v1398 = vand.u32 %v1397, 4294901760
    %v1399 = vsub.f32 %v1397, %v1398
    %v1400 = vand.u32 %v1399, 4294901760
    %1401 = vmatpush1.msra.mxu0 %v1400
    %1402 = vmatprep.subr.mxu0 0.0
    %v1403 = vand.u32 %v1228, 4294901760
    %v1404 = vsub.f32 %v1228, %v1403
    %v1405 = vand.u32 %v1404, 4294901760
    %v1406 = vsub.f32 %v1404, %v1405
    %v1407 = vand.u32 %v1406, 4294901760
    %1408 = vmatpush1.msra.mxu0 %v1407
    %1409 = vmatprep.subr.mxu0 0.0
    %v1410 = vand.u32 %v1229, 4294901760
    %v1411 = vsub.f32 %v1229, %v1410
    %v1412 = vand.u32 %v1411, 4294901760
    %v1413 = vsub.f32 %v1411, %v1412
    %v1414 = vand.u32 %v1413, 4294901760
    %1415 = vmatpush1.msra.mxu0 %v1414
    %1416 = vmatprep.subr.mxu0 0.0
    %v1417 = vand.u32 %v1230, 4294901760
    %v1418 = vsub.f32 %v1230, %v1417
    %v1419 = vand.u32 %v1418, 4294901760
    %v1420 = vsub.f32 %v1418, %v1419
    %v1421 = vand.u32 %v1420, 4294901760
    %1422 = vmatpush1.msra.mxu0 %v1421
    %1423 = vmatprep.subr.mxu0 0.0
    %v1424 = vand.u32 %v1231, 4294901760
    %v1425 = vsub.f32 %v1231, %v1424
    %v1426 = vand.u32 %v1425, 4294901760
    %v1427 = vsub.f32 %v1425, %v1426
    %v1428 = vand.u32 %v1427, 4294901760
    %1429 = vmatpush1.msra.mxu0 %v1428
    %1430 = vmatprep.subr.mxu0 0.0
    %v1431 = vand.u32 %v1232, 4294901760
    %v1432 = vsub.f32 %v1232, %v1431
    %v1433 = vand.u32 %v1432, 4294901760
    %v1434 = vsub.f32 %v1432, %v1433
    %v1435 = vand.u32 %v1434, 4294901760
    %1436 = vmatpush1.msra.mxu0 %v1435
    %1437 = vmatprep.subr.mxu0 0.0
    %v1438 = vand.u32 %v1233, 4294901760
    %v1439 = vsub.f32 %v1233, %v1438
    %v1440 = vand.u32 %v1439, 4294901760
    %v1441 = vsub.f32 %v1439, %v1440
    %v1442 = vand.u32 %v1441, 4294901760
    %1443 = vmatpush1.msra.mxu0 %v1442
    %1444 = vmatprep.subr.mxu0 0.0
    %1445 = vmatpush1.msra.mxu0 0.0
    %1446 = vmatprep.subr.mxu0 0.0
    %1447 = vmatpush1.msra.mxu0 0.0
    %1448 = vmatprep.subr.mxu0 0.0
    %1449 = vmatpush1.msra.mxu0 0.0
    %1450 = vmatprep.subr.mxu0 0.0
    %1451 = vmatpush1.msra.mxu0 0.0
    %1452 = vmatprep.subr.mxu0 0.0
    %1453 = vmatpush1.msra.mxu0 0.0
    %1454 = vmatprep.subr.mxu0 0.0
    %1455 = vmatpush1.msra.mxu0 0.0
    %1456 = vmatprep.subr.mxu0 0.0
    %1457 = vmatpush1.msra.mxu0 0.0
    %1458 = vmatprep.subr.mxu0 0.0
    %1459 = vmatpush1.msra.mxu0 0.0
    %1460 = vmatprep.subr.mxu0 0.0
    %1461 = vmatpush1.msra.mxu0 0.0
    %1462 = vmatprep.subr.mxu0 0.0
    %1463 = vmatpush1.msra.mxu0 0.0
    %1464 = vmatprep.subr.mxu0 0.0
    %1465 = vmatpush1.msra.mxu0 0.0
    %1466 = vmatprep.subr.mxu0 0.0
    %1467 = vmatpush1.msra.mxu0 0.0
    %1468 = vmatprep.subr.mxu0 0.0
    %1469 = vmatpush1.msra.mxu0 0.0
    %1470 = vmatprep.subr.mxu0 0.0
    %1471 = vmatpush1.msra.mxu0 0.0
    %1472 = vmatprep.subr.mxu0 0.0
    %1473 = vmatpush1.msra.mxu0 0.0
    %1474 = vmatprep.subr.mxu0 0.0
    %1475 = vmatpush1.msra.mxu0 0.0
    %1476 = vmatprep.mubr.f32.mxu0 0.0
    %v1477 = vand.u32 %v1217, 4294901760
    %1478 = vmatmul.mubr.f32.gmra.mrb[0].mxu0 %v1477
    %v1479 = vpop.f32.mrb[0].mxu0
    %v1480 = vadd.f32 %v1329, %v1479
    %v1481 = vpop.f32.mrb[0].mxu0
    %1482 = vdwg.mxu0
    %1483 = vmatprep.subr.mxu0 0.0
    %v1484 = vand.u32 %v1218, 4294901760
    %v1485 = vsub.f32 %v1218, %v1484
    %1486 = vmatpush1.msra.mxu0 %v1485
    %1487 = vmatprep.subr.mxu0 0.0
    %v1488 = vand.u32 %v1219, 4294901760
    %v1489 = vsub.f32 %v1219, %v1488
    %1490 = vmatpush1.msra.mxu0 %v1489
    %1491 = vmatprep.subr.mxu0 0.0
    %v1492 = vand.u32 %v1220, 4294901760
    %v1493 = vsub.f32 %v1220, %v1492
    %1494 = vmatpush1.msra.mxu0 %v1493
    %1495 = vmatprep.subr.mxu0 0.0
    %v1496 = vand.u32 %v1221, 4294901760
    %v1497 = vsub.f32 %v1221, %v1496
    %1498 = vmatpush1.msra.mxu0 %v1497
    %1499 = vmatprep.subr.mxu0 0.0
    %v1500 = vand.u32 %v1222, 4294901760
    %v1501 = vsub.f32 %v1222, %v1500
    %1502 = vmatpush1.msra.mxu0 %v1501
    %1503 = vmatprep.subr.mxu0 0.0
    %v1504 = vand.u32 %v1223, 4294901760
    %v1505 = vsub.f32 %v1223, %v1504
    %1506 = vmatpush1.msra.mxu0 %v1505
    %1507 = vmatprep.subr.mxu0 0.0
    %v1508 = vand.u32 %v1224, 4294901760
    %v1509 = vsub.f32 %v1224, %v1508
    %1510 = vmatpush1.msra.mxu0 %v1509
    %1511 = vmatprep.subr.mxu0 0.0
    %v1512 = vand.u32 %v1225, 4294901760
    %v1513 = vsub.f32 %v1225, %v1512
    %1514 = vmatpush1.msra.mxu0 %v1513
    %1515 = vmatprep.subr.mxu0 0.0
    %v1516 = vand.u32 %v1226, 4294901760
    %v1517 = vsub.f32 %v1226, %v1516
    %1518 = vmatpush1.msra.mxu0 %v1517
    %1519 = vmatprep.subr.mxu0 0.0
    %v1520 = vand.u32 %v1227, 4294901760
    %v1521 = vsub.f32 %v1227, %v1520
    %1522 = vmatpush1.msra.mxu0 %v1521
    %1523 = vmatprep.subr.mxu0 0.0
    %v1524 = vand.u32 %v1228, 4294901760
    %v1525 = vsub.f32 %v1228, %v1524
    %1526 = vmatpush1.msra.mxu0 %v1525
    %1527 = vmatprep.subr.mxu0 0.0
    %v1528 = vand.u32 %v1229, 4294901760
    %v1529 = vsub.f32 %v1229, %v1528
    %1530 = vmatpush1.msra.mxu0 %v1529
    %1531 = vmatprep.subr.mxu0 0.0
    %v1532 = vand.u32 %v1230, 4294901760
    %v1533 = vsub.f32 %v1230, %v1532
    %1534 = vmatpush1.msra.mxu0 %v1533
    %1535 = vmatprep.subr.mxu0 0.0
    %v1536 = vand.u32 %v1231, 4294901760
    %v1537 = vsub.f32 %v1231, %v1536
    %1538 = vmatpush1.msra.mxu0 %v1537
    %1539 = vmatprep.subr.mxu0 0.0
    %v1540 = vand.u32 %v1232, 4294901760
    %v1541 = vsub.f32 %v1232, %v1540
    %1542 = vmatpush1.msra.mxu0 %v1541
    %1543 = vmatprep.subr.mxu0 0.0
    %v1544 = vand.u32 %v1233, 4294901760
    %v1545 = vsub.f32 %v1233, %v1544
    %1546 = vmatpush1.msra.mxu0 %v1545
    %1547 = vmatprep.subr.mxu0 0.0
    %1548 = vmatpush1.msra.mxu0 0.0
    %1549 = vmatprep.subr.mxu0 0.0
    %1550 = vmatpush1.msra.mxu0 0.0
    %1551 = vmatprep.subr.mxu0 0.0
    %1552 = vmatpush1.msra.mxu0 0.0
    %1553 = vmatprep.subr.mxu0 0.0
    %1554 = vmatpush1.msra.mxu0 0.0
    %1555 = vmatprep.subr.mxu0 0.0
    %1556 = vmatpush1.msra.mxu0 0.0
    %1557 = vmatprep.subr.mxu0 0.0
    %1558 = vmatpush1.msra.mxu0 0.0
    %1559 = vmatprep.subr.mxu0 0.0
    %1560 = vmatpush1.msra.mxu0 0.0
    %1561 = vmatprep.subr.mxu0 0.0
    %1562 = vmatpush1.msra.mxu0 0.0
    %1563 = vmatprep.subr.mxu0 0.0
    %1564 = vmatpush1.msra.mxu0 0.0
    %1565 = vmatprep.subr.mxu0 0.0
    %1566 = vmatpush1.msra.mxu0 0.0
    %1567 = vmatprep.subr.mxu0 0.0
    %1568 = vmatpush1.msra.mxu0 0.0
    %1569 = vmatprep.subr.mxu0 0.0
    %1570 = vmatpush1.msra.mxu0 0.0
    %1571 = vmatprep.subr.mxu0 0.0
    %1572 = vmatpush1.msra.mxu0 0.0
    %1573 = vmatprep.subr.mxu0 0.0
    %1574 = vmatpush1.msra.mxu0 0.0
    %1575 = vmatprep.subr.mxu0 0.0
    %1576 = vmatpush1.msra.mxu0 0.0
    %1577 = vmatprep.subr.mxu0 0.0
    %1578 = vmatpush1.msra.mxu0 0.0
    %1579 = vmatprep.mubr.f32.mxu0 0.0
    %v1580 = vand.u32 %v1217, 4294901760
    %v1581 = vsub.f32 %v1217, %v1580
    %1582 = vmatmul.mubr.f32.gmra.mrb[0].mxu0 %v1581
    %v1583 = vpop.f32.mrb[0].mxu0
    %v1584 = vadd.f32 %v1480, %v1583
    %v1585 = vpop.f32.mrb[0].mxu0
    %1586 = vdwg.mxu0
    %1587 = vmatprep.subr.mxu0 0.0
    %v1588 = vand.u32 %v1218, 4294901760
    %1589 = vmatpush1.msra.mxu0 %v1588
    %1590 = vmatprep.subr.mxu0 0.0
    %v1591 = vand.u32 %v1219, 4294901760
    %1592 = vmatpush1.msra.mxu0 %v1591
    %1593 = vmatprep.subr.mxu0 0.0
    %v1594 = vand.u32 %v1220, 4294901760
    %1595 = vmatpush1.msra.mxu0 %v1594
    %1596 = vmatprep.subr.mxu0 0.0
    %v1597 = vand.u32 %v1221, 4294901760
    %1598 = vmatpush1.msra.mxu0 %v1597
    %1599 = vmatprep.subr.mxu0 0.0
    %v1600 = vand.u32 %v1222, 4294901760
    %1601 = vmatpush1.msra.mxu0 %v1600
    %1602 = vmatprep.subr.mxu0 0.0
    %v1603 = vand.u32 %v1223, 4294901760
    %1604 = vmatpush1.msra.mxu0 %v1603
    %1605 = vmatprep.subr.mxu0 0.0
    %v1606 = vand.u32 %v1224, 4294901760
    %1607 = vmatpush1.msra.mxu0 %v1606
    %1608 = vmatprep.subr.mxu0 0.0
    %v1609 = vand.u32 %v1225, 4294901760
    %1610 = vmatpush1.msra.mxu0 %v1609
    %1611 = vmatprep.subr.mxu0 0.0
    %v1612 = vand.u32 %v1226, 4294901760
    %1613 = vmatpush1.msra.mxu0 %v1612
    %1614 = vmatprep.subr.mxu0 0.0
    %v1615 = vand.u32 %v1227, 4294901760
    %1616 = vmatpush1.msra.mxu0 %v1615
    %1617 = vmatprep.subr.mxu0 0.0
    %v1618 = vand.u32 %v1228, 4294901760
    %1619 = vmatpush1.msra.mxu0 %v1618
    %1620 = vmatprep.subr.mxu0 0.0
    %v1621 = vand.u32 %v1229, 4294901760
    %1622 = vmatpush1.msra.mxu0 %v1621
    %1623 = vmatprep.subr.mxu0 0.0
    %v1624 = vand.u32 %v1230, 4294901760
    %1625 = vmatpush1.msra.mxu0 %v1624
    %1626 = vmatprep.subr.mxu0 0.0
    %v1627 = vand.u32 %v1231, 4294901760
    %1628 = vmatpush1.msra.mxu0 %v1627
    %1629 = vmatprep.subr.mxu0 0.0
    %v1630 = vand.u32 %v1232, 4294901760
    %1631 = vmatpush1.msra.mxu0 %v1630
    %1632 = vmatprep.subr.mxu0 0.0
    %v1633 = vand.u32 %v1233, 4294901760
    %1634 = vmatpush1.msra.mxu0 %v1633
    %1635 = vmatprep.subr.mxu0 0.0
    %1636 = vmatpush1.msra.mxu0 0.0
    %1637 = vmatprep.subr.mxu0 0.0
    %1638 = vmatpush1.msra.mxu0 0.0
    %1639 = vmatprep.subr.mxu0 0.0
    %1640 = vmatpush1.msra.mxu0 0.0
    %1641 = vmatprep.subr.mxu0 0.0
    %1642 = vmatpush1.msra.mxu0 0.0
    %1643 = vmatprep.subr.mxu0 0.0
    %1644 = vmatpush1.msra.mxu0 0.0
    %1645 = vmatprep.subr.mxu0 0.0
    %1646 = vmatpush1.msra.mxu0 0.0
    %1647 = vmatprep.subr.mxu0 0.0
    %1648 = vmatpush1.msra.mxu0 0.0
    %1649 = vmatprep.subr.mxu0 0.0
    %1650 = vmatpush1.msra.mxu0 0.0
    %1651 = vmatprep.subr.mxu0 0.0
    %1652 = vmatpush1.msra.mxu0 0.0
    %1653 = vmatprep.subr.mxu0 0.0
    %1654 = vmatpush1.msra.mxu0 0.0
    %1655 = vmatprep.subr.mxu0 0.0
    %1656 = vmatpush1.msra.mxu0 0.0
    %1657 = vmatprep.subr.mxu0 0.0
    %1658 = vmatpush1.msra.mxu0 0.0
    %1659 = vmatprep.subr.mxu0 0.0
    %1660 = vmatpush1.msra.mxu0 0.0
    %1661 = vmatprep.subr.mxu0 0.0
    %1662 = vmatpush1.msra.mxu0 0.0
    %1663 = vmatprep.subr.mxu0 0.0
    %1664 = vmatpush1.msra.mxu0 0.0
    %1665 = vmatprep.subr.mxu0 0.0
    %1666 = vmatpush1.msra.mxu0 0.0
    %1667 = vmatprep.mubr.f32.mxu0 0.0
    %v1668 = vand.u32 %v1217, 4294901760
    %v1669 = vsub.f32 %v1217, %v1668
    %v1670 = vand.u32 %v1669, 4294901760
    %1671 = vmatmul.mubr.f32.gmra.mrb[0].mxu0 %v1670
    %v1672 = vpop.f32.mrb[0].mxu0
    %v1673 = vadd.f32 %v1584, %v1672
    %v1674 = vpop.f32.mrb[0].mxu0
    %1675 = vdwg.mxu0
    %1676 = vmatprep.subr.mxu0 0.0
    %v1677 = vand.u32 %v1218, 4294901760
    %v1678 = vsub.f32 %v1218, %v1677
    %v1679 = vand.u32 %v1678, 4294901760
    %1680 = vmatpush1.msra.mxu0 %v1679
    %1681 = vmatprep.subr.mxu0 0.0
    %v1682 = vand.u32 %v1219, 4294901760
    %v1683 = vsub.f32 %v1219, %v1682
    %v1684 = vand.u32 %v1683, 4294901760
    %1685 = vmatpush1.msra.mxu0 %v1684
    %1686 = vmatprep.subr.mxu0 0.0
    %v1687 = vand.u32 %v1220, 4294901760
    %v1688 = vsub.f32 %v1220, %v1687
    %v1689 = vand.u32 %v1688, 4294901760
    %1690 = vmatpush1.msra.mxu0 %v1689
    %1691 = vmatprep.subr.mxu0 0.0
    %v1692 = vand.u32 %v1221, 4294901760
    %v1693 = vsub.f32 %v1221, %v1692
    %v1694 = vand.u32 %v1693, 4294901760
    %1695 = vmatpush1.msra.mxu0 %v1694
    %1696 = vmatprep.subr.mxu0 0.0
    %v1697 = vand.u32 %v1222, 4294901760
    %v1698 = vsub.f32 %v1222, %v1697
    %v1699 = vand.u32 %v1698, 4294901760
    %1700 = vmatpush1.msra.mxu0 %v1699
    %1701 = vmatprep.subr.mxu0 0.0
    %v1702 = vand.u32 %v1223, 4294901760
    %v1703 = vsub.f32 %v1223, %v1702
    %v1704 = vand.u32 %v1703, 4294901760
    %1705 = vmatpush1.msra.mxu0 %v1704
    %1706 = vmatprep.subr.mxu0 0.0
    %v1707 = vand.u32 %v1224, 4294901760
    %v1708 = vsub.f32 %v1224, %v1707
    %v1709 = vand.u32 %v1708, 4294901760
    %1710 = vmatpush1.msra.mxu0 %v1709
    %1711 = vmatprep.subr.mxu0 0.0
    %v1712 = vand.u32 %v1225, 4294901760
    %v1713 = vsub.f32 %v1225, %v1712
    %v1714 = vand.u32 %v1713, 4294901760
    %1715 = vmatpush1.msra.mxu0 %v1714
    %1716 = vmatprep.subr.mxu0 0.0
    %v1717 = vand.u32 %v1226, 4294901760
    %v1718 = vsub.f32 %v1226, %v1717
    %v1719 = vand.u32 %v1718, 4294901760
    %1720 = vmatpush1.msra.mxu0 %v1719
    %1721 = vmatprep.subr.mxu0 0.0
    %v1722 = vand.u32 %v1227, 4294901760
    %v1723 = vsub.f32 %v1227, %v1722
    %v1724 = vand.u32 %v1723, 4294901760
    %1725 = vmatpush1.msra.mxu0 %v1724
    %1726 = vmatprep.subr.mxu0 0.0
    %v1727 = vand.u32 %v1228, 4294901760
    %v1728 = vsub.f32 %v1228, %v1727
    %v1729 = vand.u32 %v1728, 4294901760
    %1730 = vmatpush1.msra.mxu0 %v1729
    %1731 = vmatprep.subr.mxu0 0.0
    %v1732 = vand.u32 %v1229, 4294901760
    %v1733 = vsub.f32 %v1229, %v1732
    %v1734 = vand.u32 %v1733, 4294901760
    %1735 = vmatpush1.msra.mxu0 %v1734
    %1736 = vmatprep.subr.mxu0 0.0
    %v1737 = vand.u32 %v1230, 4294901760
    %v1738 = vsub.f32 %v1230, %v1737
    %v1739 = vand.u32 %v1738, 4294901760
    %1740 = vmatpush1.msra.mxu0 %v1739
    %1741 = vmatprep.subr.mxu0 0.0
    %v1742 = vand.u32 %v1231, 4294901760
    %v1743 = vsub.f32 %v1231, %v1742
    %v1744 = vand.u32 %v1743, 4294901760
    %1745 = vmatpush1.msra.mxu0 %v1744
    %1746 = vmatprep.subr.mxu0 0.0
    %v1747 = vand.u32 %v1232, 4294901760
    %v1748 = vsub.f32 %v1232, %v1747
    %v1749 = vand.u32 %v1748, 4294901760
    %1750 = vmatpush1.msra.mxu0 %v1749
    %1751 = vmatprep.subr.mxu0 0.0
    %v1752 = vand.u32 %v1233, 4294901760
    %v1753 = vsub.f32 %v1233, %v1752
    %v1754 = vand.u32 %v1753, 4294901760
    %1755 = vmatpush1.msra.mxu0 %v1754
    %1756 = vmatprep.subr.mxu0 0.0
    %1757 = vmatpush1.msra.mxu0 0.0
    %1758 = vmatprep.subr.mxu0 0.0
    %1759 = vmatpush1.msra.mxu0 0.0
    %1760 = vmatprep.subr.mxu0 0.0
    %1761 = vmatpush1.msra.mxu0 0.0
    %1762 = vmatprep.subr.mxu0 0.0
    %1763 = vmatpush1.msra.mxu0 0.0
    %1764 = vmatprep.subr.mxu0 0.0
    %1765 = vmatpush1.msra.mxu0 0.0
    %1766 = vmatprep.subr.mxu0 0.0
    %1767 = vmatpush1.msra.mxu0 0.0
    %1768 = vmatprep.subr.mxu0 0.0
    %1769 = vmatpush1.msra.mxu0 0.0
    %1770 = vmatprep.subr.mxu0 0.0
    %1771 = vmatpush1.msra.mxu0 0.0
    %1772 = vmatprep.subr.mxu0 0.0
    %1773 = vmatpush1.msra.mxu0 0.0
    %1774 = vmatprep.subr.mxu0 0.0
    %1775 = vmatpush1.msra.mxu0 0.0
    %1776 = vmatprep.subr.mxu0 0.0
    %1777 = vmatpush1.msra.mxu0 0.0
    %1778 = vmatprep.subr.mxu0 0.0
    %1779 = vmatpush1.msra.mxu0 0.0
    %1780 = vmatprep.subr.mxu0 0.0
    %1781 = vmatpush1.msra.mxu0 0.0
    %1782 = vmatprep.subr.mxu0 0.0
    %1783 = vmatpush1.msra.mxu0 0.0
    %1784 = vmatprep.subr.mxu0 0.0
    %1785 = vmatpush1.msra.mxu0 0.0
    %1786 = vmatprep.subr.mxu0 0.0
    %1787 = vmatpush1.msra.mxu0 0.0
    %1788 = vmatprep.mubr.f32.mxu0 0.0
    %v1789 = vand.u32 %v1217, 4294901760
    %1790 = vmatmul.mubr.f32.gmra.mrb[0].mxu0 %v1789
    %v1791 = vpop.f32.mrb[0].mxu0
    %v1792 = vadd.f32 %v1673, %v1791
    %v1793 = vpop.f32.mrb[0].mxu0
    %1794 = vdwg.mxu0
    %1795 = vmatprep.subr.mxu0 0.0
    %v1796 = vand.u32 %v1218, 4294901760
    %1797 = vmatpush1.msra.mxu0 %v1796
    %1798 = vmatprep.subr.mxu0 0.0
    %v1799 = vand.u32 %v1219, 4294901760
    %1800 = vmatpush1.msra.mxu0 %v1799
    %1801 = vmatprep.subr.mxu0 0.0
    %v1802 = vand.u32 %v1220, 4294901760
    %1803 = vmatpush1.msra.mxu0 %v1802
    %1804 = vmatprep.subr.mxu0 0.0
    %v1805 = vand.u32 %v1221, 4294901760
    %1806 = vmatpush1.msra.mxu0 %v1805
    %1807 = vmatprep.subr.mxu0 0.0
    %v1808 = vand.u32 %v1222, 4294901760
    %1809 = vmatpush1.msra.mxu0 %v1808
    %1810 = vmatprep.subr.mxu0 0.0
    %v1811 = vand.u32 %v1223, 4294901760
    %1812 = vmatpush1.msra.mxu0 %v1811
    %1813 = vmatprep.subr.mxu0 0.0
    %v1814 = vand.u32 %v1224, 4294901760
    %1815 = vmatpush1.msra.mxu0 %v1814
    %1816 = vmatprep.subr.mxu0 0.0
    %v1817 = vand.u32 %v1225, 4294901760
    %1818 = vmatpush1.msra.mxu0 %v1817
    %1819 = vmatprep.subr.mxu0 0.0
    %v1820 = vand.u32 %v1226, 4294901760
    %1821 = vmatpush1.msra.mxu0 %v1820
    %1822 = vmatprep.subr.mxu0 0.0
    %v1823 = vand.u32 %v1227, 4294901760
    %1824 = vmatpush1.msra.mxu0 %v1823
    %1825 = vmatprep.subr.mxu0 0.0
    %v1826 = vand.u32 %v1228, 4294901760
    %1827 = vmatpush1.msra.mxu0 %v1826
    %1828 = vmatprep.subr.mxu0 0.0
    %v1829 = vand.u32 %v1229, 4294901760
    %1830 = vmatpush1.msra.mxu0 %v1829
    %1831 = vmatprep.subr.mxu0 0.0
    %v1832 = vand.u32 %v1230, 4294901760
    %1833 = vmatpush1.msra.mxu0 %v1832
    %1834 = vmatprep.subr.mxu0 0.0
    %v1835 = vand.u32 %v1231, 4294901760
    %1836 = vmatpush1.msra.mxu0 %v1835
    %1837 = vmatprep.subr.mxu0 0.0
    %v1838 = vand.u32 %v1232, 4294901760
    %1839 = vmatpush1.msra.mxu0 %v1838
    %1840 = vmatprep.subr.mxu0 0.0
    %v1841 = vand.u32 %v1233, 4294901760
    %1842 = vmatpush1.msra.mxu0 %v1841
    %1843 = vmatprep.subr.mxu0 0.0
    %1844 = vmatpush1.msra.mxu0 0.0
    %1845 = vmatprep.subr.mxu0 0.0
    %1846 = vmatpush1.msra.mxu0 0.0
    %1847 = vmatprep.subr.mxu0 0.0
    %1848 = vmatpush1.msra.mxu0 0.0
    %1849 = vmatprep.subr.mxu0 0.0
    %1850 = vmatpush1.msra.mxu0 0.0
    %1851 = vmatprep.subr.mxu0 0.0
    %1852 = vmatpush1.msra.mxu0 0.0
    %1853 = vmatprep.subr.mxu0 0.0
    %1854 = vmatpush1.msra.mxu0 0.0
    %1855 = vmatprep.subr.mxu0 0.0
    %1856 = vmatpush1.msra.mxu0 0.0
    %1857 = vmatprep.subr.mxu0 0.0
    %1858 = vmatpush1.msra.mxu0 0.0
    %1859 = vmatprep.subr.mxu0 0.0
    %1860 = vmatpush1.msra.mxu0 0.0
    %1861 = vmatprep.subr.mxu0 0.0
    %1862 = vmatpush1.msra.mxu0 0.0
    %1863 = vmatprep.subr.mxu0 0.0
    %1864 = vmatpush1.msra.mxu0 0.0
    %1865 = vmatprep.subr.mxu0 0.0
    %1866 = vmatpush1.msra.mxu0 0.0
    %1867 = vmatprep.subr.mxu0 0.0
    %1868 = vmatpush1.msra.mxu0 0.0
    %1869 = vmatprep.subr.mxu0 0.0
    %1870 = vmatpush1.msra.mxu0 0.0
    %1871 = vmatprep.subr.mxu0 0.0
    %1872 = vmatpush1.msra.mxu0 0.0
    %1873 = vmatprep.subr.mxu0 0.0
    %1874 = vmatpush1.msra.mxu0 0.0
    %1875 = vmatprep.mubr.f32.mxu0 0.0
    %v1876 = vand.u32 %v1217, 4294901760
    %1877 = vmatmul.mubr.f32.gmra.mrb[0].mxu0 %v1876
    %v1878 = vpop.f32.mrb[0].mxu0
    %v1879 = vadd.f32 %v1792, %v1878
    %v1880 = vpop.f32.mrb[0].mxu0
    %1881 = vdwg.mxu0
    %vm1882 = vcmask 31744
    %1883 = vst.msk [vmem:[%s7] sm:$0xff] %vm1882, %v1879
    // Predicated region
    $region46: #{tpu_custom_call.1} parent=1 // pred_check
      _
    $region47: #{tpu_custom_call.1} parent=1 // pred_check_branch
      %1885 = sbr.rel (0) target = $region49
    $region48: #{tpu_custom_call.1} parent=1 // pred_region
      _
    $region49: #{tpu_custom_call.1} parent=1 // pred_fallthru
      _
    // Predicated region
    $region50: #{tpu_custom_call.1} parent=1 // pred_check
      _
    $region51: #{tpu_custom_call.1} parent=1 // pred_check_branch
      %1887 = sbr.rel (0) target = $region53
    $region52: #{tpu_custom_call.1} parent=1 // pred_region
      _
    $region53: #{tpu_custom_call.1} parent=1 // pred_fallthru
      _
    %1888 = vsyncpa [#allocation3], 1
    %1889 = vsyncpa [#allocation5], 1
    %1890 = vsyncpa [#allocation8], 1

</llo_original>
